<compile_context>
chip_gen: v7x
topology: tpu7x:2x2x1
jax: 0.10.0
libtpu: 0.0.40
codegen_flags: <defaults>
</compile_context>

<pallas_src>
import functools

import jax
import jax.numpy as jnp
from jax.experimental import pallas as pl
from jax.experimental.pallas import tpu as pltpu


def _sesa_kernel(x_ref, w12_ref, wc_ref, out_ref, *, bt, C, H, W, K):
    """One batch tile, flat (lane-dense) spatial layout.

    x_ref  : (Bt, C, H*W) VMEM - input, flattened spatial axis on lanes
    w12_ref: (2*C, C//r)  VMEM - [w1^T ; w2] stacked along the channel axis
    wc_ref : (2*K*K,)     SMEM - KxK conv weight, flattened [in_ch, kh, kw]
    out_ref: (Bt, C, H*W) VMEM
    """
    HW = H * W
    P = K // 2
    f32 = jnp.float32

    # SE weights (already f32 from the wrapper); one merged VMEM buffer.
    w1t = w12_ref[pl.ds(0, C), :]            # (C, Cr)  first Linear, transposed
    w2 = w12_ref[pl.ds(C, C), :]             # (C, Cr)  second Linear

    # Conv taps as SMEM scalars, hoisted out of the batch loop.
    wa = [[wc_ref[di * K + dj] for dj in range(K)] for di in range(K)]          # avg ch
    wm = [[wc_ref[K * K + di * K + dj] for dj in range(K)] for di in range(K)]  # max ch

    # Hoisted validity masks.  pltpu.roll wraps around, so every shifted tap
    # that falls outside the image must be masked explicitly (the zero padding
    # of the previous version is gone).
    pos = jax.lax.broadcasted_iota(jnp.int32, (1, HW), 1)      # flat spatial index
    col = pos % W                                              # column index
    rmasks = []                                                # row validity, per kh
    for di in range(K):
        d = (di - P) * W
        rmasks.append(jnp.logical_and(pos >= -d, pos < HW - d))
    cmasks = []                                                # col validity, per kw
    for dj in range(K):
        ox = dj - P
        cmasks.append(jnp.logical_and(col + ox >= 0, col + ox < W))

    for b in range(bt):                      # batch rows of this block (unrolled)
        x_b = x_ref[b].astype(f32)                                      # (C, HW)

        # ---------- SE gate: global avg-pool -> FC -> ReLU -> FC -> sigmoid ----
        # Pure VPU broadcast-multiply + cross-sublane/lane reductions; no
        # degenerate (32x2) MXU matmuls, no lane<->sublane relayouts.
        pooled = jnp.sum(x_b, axis=1, keepdims=True) * (1.0 / HW)       # (C, 1)
        h1 = jnp.maximum(
            jnp.sum(w1t * pooled, axis=0, keepdims=True), 0.0)          # (1, Cr)
        gate = jax.nn.sigmoid(
            jnp.sum(w2 * h1, axis=1, keepdims=True))                    # (C, 1)
        # NOTE: the full-size x*gate multiply is deferred until after the conv
        # so the SE tensor is never live across the 25-tap region.

        # ---------- Spatial attention: channel mean/max -> KxK conv -> sigmoid -
        avg = jnp.mean(x_b, axis=0, keepdims=True)                      # (1, HW)
        mx = jnp.max(x_b, axis=0, keepdims=True)                        # (1, HW)

        # Stage 1: the K row shifts (multiples of W), row-masked once each.
        r_avg, r_max = [], []
        for di in range(K):
            d = (di - P) * W
            if d == 0:
                r_avg.append(avg)
                r_max.append(mx)
            else:
                s = (-d) % HW                # roll(x, s)[q] == x[(q + d) % HW]
                r_avg.append(jnp.where(rmasks[di], pltpu.roll(avg, s, axis=1), 0.0))
                r_max.append(jnp.where(rmasks[di], pltpu.roll(mx, s, axis=1), 0.0))

        # Stage 2: per kernel column, accumulate the K row taps (unmasked, at
        # the unpadded 256-lane width), then a single column shift + mask.
        conv = jnp.zeros((1, HW), f32)
        for dj in range(K):
            ox = dj - P
            part = jnp.zeros((1, HW), f32)
            for di in range(K):
                part = part + wa[di][dj] * r_avg[di] + wm[di][dj] * r_max[di]
            if ox == 0:
                conv = conv + part
            else:
                s = (-ox) % HW
                conv = conv + jnp.where(cmasks[dj], pltpu.roll(part, s, axis=1), 0.0)
        sa = jax.nn.sigmoid(conv)                                       # (1, HW)

        # ---------- Fuse: x + (x * gate) * sa  (fresh VMEM read of x) ----------
        xo = x_ref[b].astype(f32)
        out_ref[b] = (xo + (xo * gate) * sa).astype(out_ref.dtype)


def sesa_pallas(x, w1, w2, wc, *, kernel_size=5, max_batch_tile=8):
    B, C, H, W = x.shape
    K = kernel_size
    Cr = w1.shape[0]
    HW = H * W
    assert HW % 128 == 0, "flat spatial axis must be lane-dense (multiple of 128)"

    # Fold the batch into the block: largest divisor of B that is <= max_batch_tile
    # (the cap bounds the in-kernel unroll; at C=32, HW=256, f32 each step moves
    # <=256 KiB, far under every generation's VMEM limit).
    Bt = min(B, max_batch_tile)
    while B % Bt:
        Bt -= 1

    x_flat = x.reshape(B, C, HW)                                 # lane-dense layout
    w1t = jnp.asarray(w1, jnp.float32).T                         # (C, Cr)
    w2f = jnp.asarray(w2, jnp.float32)                           # (C, Cr)
    w12 = jnp.concatenate([w1t, w2f], axis=0)                    # (2C, Cr) single DMA
    wc_flat = wc.reshape(-1).astype(jnp.float32)                 # (2*K*K,) scalars

    kernel = functools.partial(_sesa_kernel, bt=Bt, C=C, H=H, W=W, K=K)
    out_flat = pl.pallas_call(
        kernel,
        out_shape=jax.ShapeDtypeStruct((B, C, HW), x.dtype),
        grid=(B // Bt,),
        in_specs=[
            pl.BlockSpec((Bt, C, HW), lambda b: (b, 0, 0)),      # x (batch tile)
            pl.BlockSpec((2 * C, Cr), lambda b: (0, 0)),         # [w1^T ; w2]
            pl.BlockSpec(memory_space=pltpu.MemorySpace.SMEM),   # conv taps (scalars)
        ],
        out_specs=pl.BlockSpec((Bt, C, HW), lambda b: (b, 0, 0)),
        # On v7x the batch-tile axis could additionally be split across the two
        # TensorCores with CORE_PARALLEL / pl.core_map; "parallel" is kept here
        # for portability across v5e/v6e/v7x.
        compiler_params=pltpu.CompilerParams(
            dimension_semantics=("parallel",)),
    )(x_flat, w12, wc_flat)
    return out_flat.reshape(B, C, H, W)


def sesa_reference(x, w1, w2, wc):
    """Pure-JAX reference mirroring the PyTorch module."""
    pooled = x.mean(axis=(2, 3))                                # (B, C)
    h1 = jax.nn.relu(pooled @ w1.T)
    gate = jax.nn.sigmoid(h1 @ w2.T)                            # (B, C)
    se = x * gate[:, :, None, None]
    avg = x.mean(axis=1, keepdims=True)
    mx = x.max(axis=1, keepdims=True)
    cat = jnp.concatenate([avg, mx], axis=1)                    # (B, 2, H, W)
    conv = jax.lax.conv_general_dilated(
        cat, wc, window_strides=(1, 1),
        padding=[(wc.shape[2] // 2,) * 2, (wc.shape[3] // 2,) * 2],
        dimension_numbers=("NCHW", "OIHW", "NCHW"))
    sa = jax.nn.sigmoid(conv)                                   # (B, 1, H, W)
    return x + se * sa


if __name__ == "__main__":
    # Shapes consistent with the module: in_channels=32, reduction_ratio=16,
    # kernel_size=5, batch=2, spatial=16.
    B, C, H, W = 2, 32, 16, 16
    R, K = 16, 5
    Cr = C // R

    key = jax.random.PRNGKey(0)
    kx, k1, k2, kc = jax.random.split(key, 4)
    x = jax.random.normal(kx, (B, C, H, W), dtype=jnp.float32)
    w1 = jax.random.normal(k1, (Cr, C), dtype=jnp.float32) * 0.3       # Linear(C -> C//R)
    w2 = jax.random.normal(k2, (C, Cr), dtype=jnp.float32) * 0.3       # Linear(C//R -> C)
    wc = jax.random.normal(kc, (1, 2, K, K), dtype=jnp.float32) * 0.2  # Conv2d(2 -> 1)

    out = jax.block_until_ready(sesa_pallas(x, w1, w2, wc, kernel_size=K))
    ref = jax.block_until_ready(sesa_reference(x, w1, w2, wc))

    max_err = float(jnp.max(jnp.abs(out - ref)))
    assert out.shape == (B, C, H, W)
    assert max_err < 1e-3, f"mismatch vs reference: {max_err}"
    print("KERNEL_OK")
</pallas_src>

<mosaic_0001>
module attributes {stable_mosaic.version = 11 : i64} {
  func.func @_sesa_kernel(%arg0: i32, %arg1: memref<2x32x256xf32, #tpu.memory_space<vmem>>, %arg2: memref<64x2xf32, #tpu.memory_space<vmem>>, %arg3: memref<50xf32, #tpu.memory_space<smem>>, %arg4: memref<2x32x256xf32, #tpu.memory_space<vmem>>) attributes {dimension_semantics = [#tpu.dimension_semantics<parallel>], iteration_bounds = array<i64: 1>, scalar_prefetch = 0 : i64, scratch_operands = 0 : i64, tpu.core_type = #tpu.core_type<tc>, window_params = [{transform_indices = @transform_0, window_bounds = array<i64: 2, 32, 256>}, {pipeline_mode = #tpu.pipeline_mode<synchronous>, transform_indices = @transform_1, window_bounds = array<i64: 64, 2>}, {transform_indices = @transform_2, window_bounds = array<i64: 50>}, {transform_indices = @transform_3, window_bounds = array<i64: 2, 32, 256>}]} {
    %c0 = arith.constant 0 : index
    %c0_0 = arith.constant 0 : index
    %0 = vector.load %arg2[%c0, %c0_0] : memref<64x2xf32, #tpu.memory_space<vmem>>, vector<32x2xf32>
    %c32 = arith.constant 32 : index
    %c0_1 = arith.constant 0 : index
    %1 = vector.load %arg2[%c32, %c0_1] : memref<64x2xf32, #tpu.memory_space<vmem>>, vector<32x2xf32>
    %c0_2 = arith.constant 0 : index
    %2 = memref.load %arg3[%c0_2] : memref<50xf32, #tpu.memory_space<smem>>
    %c1 = arith.constant 1 : index
    %3 = memref.load %arg3[%c1] : memref<50xf32, #tpu.memory_space<smem>>
    %c2 = arith.constant 2 : index
    %4 = memref.load %arg3[%c2] : memref<50xf32, #tpu.memory_space<smem>>
    %c3 = arith.constant 3 : index
    %5 = memref.load %arg3[%c3] : memref<50xf32, #tpu.memory_space<smem>>
    %c4 = arith.constant 4 : index
    %6 = memref.load %arg3[%c4] : memref<50xf32, #tpu.memory_space<smem>>
    %c5 = arith.constant 5 : index
    %7 = memref.load %arg3[%c5] : memref<50xf32, #tpu.memory_space<smem>>
    %c6 = arith.constant 6 : index
    %8 = memref.load %arg3[%c6] : memref<50xf32, #tpu.memory_space<smem>>
    %c7 = arith.constant 7 : index
    %9 = memref.load %arg3[%c7] : memref<50xf32, #tpu.memory_space<smem>>
    %c8 = arith.constant 8 : index
    %10 = memref.load %arg3[%c8] : memref<50xf32, #tpu.memory_space<smem>>
    %c9 = arith.constant 9 : index
    %11 = memref.load %arg3[%c9] : memref<50xf32, #tpu.memory_space<smem>>
    %c10 = arith.constant 10 : index
    %12 = memref.load %arg3[%c10] : memref<50xf32, #tpu.memory_space<smem>>
    %c11 = arith.constant 11 : index
    %13 = memref.load %arg3[%c11] : memref<50xf32, #tpu.memory_space<smem>>
    %c12 = arith.constant 12 : index
    %14 = memref.load %arg3[%c12] : memref<50xf32, #tpu.memory_space<smem>>
    %c13 = arith.constant 13 : index
    %15 = memref.load %arg3[%c13] : memref<50xf32, #tpu.memory_space<smem>>
    %c14 = arith.constant 14 : index
    %16 = memref.load %arg3[%c14] : memref<50xf32, #tpu.memory_space<smem>>
    %c15 = arith.constant 15 : index
    %17 = memref.load %arg3[%c15] : memref<50xf32, #tpu.memory_space<smem>>
    %c16 = arith.constant 16 : index
    %18 = memref.load %arg3[%c16] : memref<50xf32, #tpu.memory_space<smem>>
    %c17 = arith.constant 17 : index
    %19 = memref.load %arg3[%c17] : memref<50xf32, #tpu.memory_space<smem>>
    %c18 = arith.constant 18 : index
    %20 = memref.load %arg3[%c18] : memref<50xf32, #tpu.memory_space<smem>>
    %c19 = arith.constant 19 : index
    %21 = memref.load %arg3[%c19] : memref<50xf32, #tpu.memory_space<smem>>
    %c20 = arith.constant 20 : index
    %22 = memref.load %arg3[%c20] : memref<50xf32, #tpu.memory_space<smem>>
    %c21 = arith.constant 21 : index
    %23 = memref.load %arg3[%c21] : memref<50xf32, #tpu.memory_space<smem>>
    %c22 = arith.constant 22 : index
    %24 = memref.load %arg3[%c22] : memref<50xf32, #tpu.memory_space<smem>>
    %c23 = arith.constant 23 : index
    %25 = memref.load %arg3[%c23] : memref<50xf32, #tpu.memory_space<smem>>
    %c24 = arith.constant 24 : index
    %26 = memref.load %arg3[%c24] : memref<50xf32, #tpu.memory_space<smem>>
    %c25 = arith.constant 25 : index
    %27 = memref.load %arg3[%c25] : memref<50xf32, #tpu.memory_space<smem>>
    %c26 = arith.constant 26 : index
    %28 = memref.load %arg3[%c26] : memref<50xf32, #tpu.memory_space<smem>>
    %c27 = arith.constant 27 : index
    %29 = memref.load %arg3[%c27] : memref<50xf32, #tpu.memory_space<smem>>
    %c28 = arith.constant 28 : index
    %30 = memref.load %arg3[%c28] : memref<50xf32, #tpu.memory_space<smem>>
    %c29 = arith.constant 29 : index
    %31 = memref.load %arg3[%c29] : memref<50xf32, #tpu.memory_space<smem>>
    %c30 = arith.constant 30 : index
    %32 = memref.load %arg3[%c30] : memref<50xf32, #tpu.memory_space<smem>>
    %c31 = arith.constant 31 : index
    %33 = memref.load %arg3[%c31] : memref<50xf32, #tpu.memory_space<smem>>
    %c32_3 = arith.constant 32 : index
    %34 = memref.load %arg3[%c32_3] : memref<50xf32, #tpu.memory_space<smem>>
    %c33 = arith.constant 33 : index
    %35 = memref.load %arg3[%c33] : memref<50xf32, #tpu.memory_space<smem>>
    %c34 = arith.constant 34 : index
    %36 = memref.load %arg3[%c34] : memref<50xf32, #tpu.memory_space<smem>>
    %c35 = arith.constant 35 : index
    %37 = memref.load %arg3[%c35] : memref<50xf32, #tpu.memory_space<smem>>
    %c36 = arith.constant 36 : index
    %38 = memref.load %arg3[%c36] : memref<50xf32, #tpu.memory_space<smem>>
    %c37 = arith.constant 37 : index
    %39 = memref.load %arg3[%c37] : memref<50xf32, #tpu.memory_space<smem>>
    %c38 = arith.constant 38 : index
    %40 = memref.load %arg3[%c38] : memref<50xf32, #tpu.memory_space<smem>>
    %c39 = arith.constant 39 : index
    %41 = memref.load %arg3[%c39] : memref<50xf32, #tpu.memory_space<smem>>
    %c40 = arith.constant 40 : index
    %42 = memref.load %arg3[%c40] : memref<50xf32, #tpu.memory_space<smem>>
    %c41 = arith.constant 41 : index
    %43 = memref.load %arg3[%c41] : memref<50xf32, #tpu.memory_space<smem>>
    %c42 = arith.constant 42 : index
    %44 = memref.load %arg3[%c42] : memref<50xf32, #tpu.memory_space<smem>>
    %c43 = arith.constant 43 : index
    %45 = memref.load %arg3[%c43] : memref<50xf32, #tpu.memory_space<smem>>
    %c44 = arith.constant 44 : index
    %46 = memref.load %arg3[%c44] : memref<50xf32, #tpu.memory_space<smem>>
    %c45 = arith.constant 45 : index
    %47 = memref.load %arg3[%c45] : memref<50xf32, #tpu.memory_space<smem>>
    %c46 = arith.constant 46 : index
    %48 = memref.load %arg3[%c46] : memref<50xf32, #tpu.memory_space<smem>>
    %c47 = arith.constant 47 : index
    %49 = memref.load %arg3[%c47] : memref<50xf32, #tpu.memory_space<smem>>
    %c48 = arith.constant 48 : index
    %50 = memref.load %arg3[%c48] : memref<50xf32, #tpu.memory_space<smem>>
    %c49 = arith.constant 49 : index
    %51 = memref.load %arg3[%c49] : memref<50xf32, #tpu.memory_space<smem>>
    %52 = tpu.iota {dimensions = array<i32: 1>} : vector<1x256xi32>
    %c16_i32 = arith.constant 16 : i32
    %c0_i32 = arith.constant 0 : i32
    %53 = arith.cmpi eq, %c16_i32, %c0_i32 : i32
    %c1_i32 = arith.constant 1 : i32
    %54 = arith.select %53, %c1_i32, %c16_i32 : i32
    %55 = vector.broadcast %54 : i32 to vector<1x256xi32>
    %56 = arith.remsi %52, %55 : vector<1x256xi32>
    %c0_i32_4 = arith.constant 0 : i32
    %57 = vector.broadcast %c0_i32_4 : i32 to vector<1x256xi32>
    %58 = arith.cmpi ne, %56, %57 : vector<1x256xi32>
    %c0_i32_5 = arith.constant 0 : i32
    %59 = vector.broadcast %c0_i32_5 : i32 to vector<1x256xi32>
    %60 = arith.cmpi slt, %56, %59 : vector<1x256xi32>
    %c0_i32_6 = arith.constant 0 : i32
    %61 = arith.cmpi slt, %54, %c0_i32_6 : i32
    %62 = vector.broadcast %61 : i1 to vector<1x256xi1>
    %63 = vector.broadcast %62 : vector<1x256xi1> to vector<1x256xi1>
    %64 = arith.xori %60, %63 : vector<1x256xi1>
    %65 = arith.andi %64, %58 : vector<1x256xi1>
    %66 = vector.broadcast %54 : i32 to vector<1x256xi32>
    %67 = arith.addi %56, %66 : vector<1x256xi32>
    %68 = arith.select %65, %67, %56 : vector<1x256xi1>, vector<1x256xi32>
    %c32_i32 = arith.constant 32 : i32
    %69 = vector.broadcast %c32_i32 : i32 to vector<1x256xi32>
    %70 = arith.cmpi sge, %52, %69 : vector<1x256xi32>
    %c288_i32 = arith.constant 288 : i32
    %71 = vector.broadcast %c288_i32 : i32 to vector<1x256xi32>
    %72 = arith.cmpi slt, %52, %71 : vector<1x256xi32>
    %73 = arith.andi %70, %72 : vector<1x256xi1>
    %c16_i32_7 = arith.constant 16 : i32
    %74 = vector.broadcast %c16_i32_7 : i32 to vector<1x256xi32>
    %75 = arith.cmpi sge, %52, %74 : vector<1x256xi32>
    %c272_i32 = arith.constant 272 : i32
    %76 = vector.broadcast %c272_i32 : i32 to vector<1x256xi32>
    %77 = arith.cmpi slt, %52, %76 : vector<1x256xi32>
    %78 = arith.andi %75, %77 : vector<1x256xi1>
    %c-16_i32 = arith.constant -16 : i32
    %79 = vector.broadcast %c-16_i32 : i32 to vector<1x256xi32>
    %80 = arith.cmpi sge, %52, %79 : vector<1x256xi32>
    %c240_i32 = arith.constant 240 : i32
    %81 = vector.broadcast %c240_i32 : i32 to vector<1x256xi32>
    %82 = arith.cmpi slt, %52, %81 : vector<1x256xi32>
    %83 = arith.andi %80, %82 : vector<1x256xi1>
    %c-32_i32 = arith.constant -32 : i32
    %84 = vector.broadcast %c-32_i32 : i32 to vector<1x256xi32>
    %85 = arith.cmpi sge, %52, %84 : vector<1x256xi32>
    %c224_i32 = arith.constant 224 : i32
    %86 = vector.broadcast %c224_i32 : i32 to vector<1x256xi32>
    %87 = arith.cmpi slt, %52, %86 : vector<1x256xi32>
    %88 = arith.andi %85, %87 : vector<1x256xi1>
    %c-2_i32 = arith.constant -2 : i32
    %89 = vector.broadcast %c-2_i32 : i32 to vector<1x256xi32>
    %90 = arith.addi %68, %89 : vector<1x256xi32>
    %c0_i32_8 = arith.constant 0 : i32
    %91 = vector.broadcast %c0_i32_8 : i32 to vector<1x256xi32>
    %92 = arith.cmpi sge, %90, %91 : vector<1x256xi32>
    %c-2_i32_9 = arith.constant -2 : i32
    %93 = vector.broadcast %c-2_i32_9 : i32 to vector<1x256xi32>
    %94 = arith.addi %68, %93 : vector<1x256xi32>
    %c16_i32_10 = arith.constant 16 : i32
    %95 = vector.broadcast %c16_i32_10 : i32 to vector<1x256xi32>
    %96 = arith.cmpi slt, %94, %95 : vector<1x256xi32>
    %97 = arith.andi %92, %96 : vector<1x256xi1>
    %c-1_i32 = arith.constant -1 : i32
    %98 = vector.broadcast %c-1_i32 : i32 to vector<1x256xi32>
    %99 = arith.addi %68, %98 : vector<1x256xi32>
    %c0_i32_11 = arith.constant 0 : i32
    %100 = vector.broadcast %c0_i32_11 : i32 to vector<1x256xi32>
    %101 = arith.cmpi sge, %99, %100 : vector<1x256xi32>
    %c-1_i32_12 = arith.constant -1 : i32
    %102 = vector.broadcast %c-1_i32_12 : i32 to vector<1x256xi32>
    %103 = arith.addi %68, %102 : vector<1x256xi32>
    %c16_i32_13 = arith.constant 16 : i32
    %104 = vector.broadcast %c16_i32_13 : i32 to vector<1x256xi32>
    %105 = arith.cmpi slt, %103, %104 : vector<1x256xi32>
    %106 = arith.andi %101, %105 : vector<1x256xi1>
    %c1_i32_14 = arith.constant 1 : i32
    %107 = vector.broadcast %c1_i32_14 : i32 to vector<1x256xi32>
    %108 = arith.addi %68, %107 : vector<1x256xi32>
    %c0_i32_15 = arith.constant 0 : i32
    %109 = vector.broadcast %c0_i32_15 : i32 to vector<1x256xi32>
    %110 = arith.cmpi sge, %108, %109 : vector<1x256xi32>
    %c1_i32_16 = arith.constant 1 : i32
    %111 = vector.broadcast %c1_i32_16 : i32 to vector<1x256xi32>
    %112 = arith.addi %68, %111 : vector<1x256xi32>
    %c16_i32_17 = arith.constant 16 : i32
    %113 = vector.broadcast %c16_i32_17 : i32 to vector<1x256xi32>
    %114 = arith.cmpi slt, %112, %113 : vector<1x256xi32>
    %115 = arith.andi %110, %114 : vector<1x256xi1>
    %c2_i32 = arith.constant 2 : i32
    %116 = vector.broadcast %c2_i32 : i32 to vector<1x256xi32>
    %117 = arith.addi %68, %116 : vector<1x256xi32>
    %c0_i32_18 = arith.constant 0 : i32
    %118 = vector.broadcast %c0_i32_18 : i32 to vector<1x256xi32>
    %119 = arith.cmpi sge, %117, %118 : vector<1x256xi32>
    %c2_i32_19 = arith.constant 2 : i32
    %120 = vector.broadcast %c2_i32_19 : i32 to vector<1x256xi32>
    %121 = arith.addi %68, %120 : vector<1x256xi32>
    %c16_i32_20 = arith.constant 16 : i32
    %122 = vector.broadcast %c16_i32_20 : i32 to vector<1x256xi32>
    %123 = arith.cmpi slt, %121, %122 : vector<1x256xi32>
    %124 = arith.andi %119, %123 : vector<1x256xi1>
    %c0_21 = arith.constant 0 : index
    %c0_22 = arith.constant 0 : index
    %c0_23 = arith.constant 0 : index
    %125 = vector.load %arg1[%c0_21, %c0_22, %c0_23] : memref<2x32x256xf32, #tpu.memory_space<vmem>>, vector<1x32x256xf32>
    %126 = vector.shape_cast %125 : vector<1x32x256xf32> to vector<32x256xf32>
    %cst = arith.constant dense<0.000000e+00> : vector<32xf32>
    %127 = vector.multi_reduction <add>, %126, %cst [1] : vector<32x256xf32> to vector<32xf32>
    %128 = vector.shape_cast %127 : vector<32xf32> to vector<32x1xf32>
    %cst_24 = arith.constant 3.906250e-03 : f32
    %129 = vector.broadcast %cst_24 : f32 to vector<32x1xf32>
    %130 = arith.mulf %128, %129 : vector<32x1xf32>
    %131 = vector.broadcast %130 : vector<32x1xf32> to vector<32x2xf32>
    %132 = arith.mulf %0, %131 : vector<32x2xf32>
    %cst_25 = arith.constant dense<0.000000e+00> : vector<2xf32>
    %133 = vector.multi_reduction <add>, %132, %cst_25 [0] : vector<32x2xf32> to vector<2xf32>
    %134 = vector.shape_cast %133 : vector<2xf32> to vector<1x2xf32>
    %cst_26 = arith.constant 0.000000e+00 : f32
    %135 = vector.broadcast %cst_26 : f32 to vector<1x2xf32>
    %136 = arith.maximumf %134, %135 : vector<1x2xf32>
    %137 = vector.broadcast %136 : vector<1x2xf32> to vector<32x2xf32>
    %138 = arith.mulf %1, %137 : vector<32x2xf32>
    %cst_27 = arith.constant dense<0.000000e+00> : vector<32xf32>
    %139 = vector.multi_reduction <add>, %138, %cst_27 [1] : vector<32x2xf32> to vector<32xf32>
    %140 = vector.shape_cast %139 : vector<32xf32> to vector<32x1xf32>
    %141 = arith.negf %140 : vector<32x1xf32>
    %142 = math.exp %141 : vector<32x1xf32>
    %cst_28 = arith.constant 1.000000e+00 : f32
    %143 = vector.broadcast %cst_28 : f32 to vector<32x1xf32>
    %144 = arith.addf %143, %142 : vector<32x1xf32>
    %145 = arith.divf %143, %144 : vector<32x1xf32>
    %cst_29 = arith.constant dense<0.000000e+00> : vector<256xf32>
    %146 = vector.multi_reduction <add>, %126, %cst_29 [0] : vector<32x256xf32> to vector<256xf32>
    %147 = vector.shape_cast %146 : vector<256xf32> to vector<1x256xf32>
    %cst_30 = arith.constant 3.200000e+01 : f32
    %148 = vector.broadcast %cst_30 : f32 to vector<1x256xf32>
    %149 = arith.divf %147, %148 : vector<1x256xf32>
    %cst_31 = arith.constant dense<0xFF800000> : vector<256xf32>
    %150 = vector.multi_reduction <maximumf>, %126, %cst_31 [0] : vector<32x256xf32> to vector<256xf32>
    %151 = vector.shape_cast %150 : vector<256xf32> to vector<1x256xf32>
    %c32_i32_32 = arith.constant 32 : i32
    %152 = tpu.dynamic_rotate %149 by %c32_i32_32 dim 1 : vector<1x256xf32>, i32 -> vector<1x256xf32>
    %cst_33 = arith.constant 0.000000e+00 : f32
    %153 = vector.broadcast %cst_33 : f32 to vector<1x256xf32>
    %154 = arith.select %73, %152, %153 : vector<1x256xi1>, vector<1x256xf32>
    %c32_i32_34 = arith.constant 32 : i32
    %155 = tpu.dynamic_rotate %151 by %c32_i32_34 dim 1 : vector<1x256xf32>, i32 -> vector<1x256xf32>
    %cst_35 = arith.constant 0.000000e+00 : f32
    %156 = vector.broadcast %cst_35 : f32 to vector<1x256xf32>
    %157 = arith.select %73, %155, %156 : vector<1x256xi1>, vector<1x256xf32>
    %c16_i32_36 = arith.constant 16 : i32
    %158 = tpu.dynamic_rotate %149 by %c16_i32_36 dim 1 : vector<1x256xf32>, i32 -> vector<1x256xf32>
    %cst_37 = arith.constant 0.000000e+00 : f32
    %159 = vector.broadcast %cst_37 : f32 to vector<1x256xf32>
    %160 = arith.select %78, %158, %159 : vector<1x256xi1>, vector<1x256xf32>
    %c16_i32_38 = arith.constant 16 : i32
    %161 = tpu.dynamic_rotate %151 by %c16_i32_38 dim 1 : vector<1x256xf32>, i32 -> vector<1x256xf32>
    %cst_39 = arith.constant 0.000000e+00 : f32
    %162 = vector.broadcast %cst_39 : f32 to vector<1x256xf32>
    %163 = arith.select %78, %161, %162 : vector<1x256xi1>, vector<1x256xf32>
    %c240_i32_40 = arith.constant 240 : i32
    %164 = tpu.dynamic_rotate %149 by %c240_i32_40 dim 1 : vector<1x256xf32>, i32 -> vector<1x256xf32>
    %cst_41 = arith.constant 0.000000e+00 : f32
    %165 = vector.broadcast %cst_41 : f32 to vector<1x256xf32>
    %166 = arith.select %83, %164, %165 : vector<1x256xi1>, vector<1x256xf32>
    %c240_i32_42 = arith.constant 240 : i32
    %167 = tpu.dynamic_rotate %151 by %c240_i32_42 dim 1 : vector<1x256xf32>, i32 -> vector<1x256xf32>
    %cst_43 = arith.constant 0.000000e+00 : f32
    %168 = vector.broadcast %cst_43 : f32 to vector<1x256xf32>
    %169 = arith.select %83, %167, %168 : vector<1x256xi1>, vector<1x256xf32>
    %c224_i32_44 = arith.constant 224 : i32
    %170 = tpu.dynamic_rotate %149 by %c224_i32_44 dim 1 : vector<1x256xf32>, i32 -> vector<1x256xf32>
    %cst_45 = arith.constant 0.000000e+00 : f32
    %171 = vector.broadcast %cst_45 : f32 to vector<1x256xf32>
    %172 = arith.select %88, %170, %171 : vector<1x256xi1>, vector<1x256xf32>
    %c224_i32_46 = arith.constant 224 : i32
    %173 = tpu.dynamic_rotate %151 by %c224_i32_46 dim 1 : vector<1x256xf32>, i32 -> vector<1x256xf32>
    %cst_47 = arith.constant 0.000000e+00 : f32
    %174 = vector.broadcast %cst_47 : f32 to vector<1x256xf32>
    %175 = arith.select %88, %173, %174 : vector<1x256xi1>, vector<1x256xf32>
    %cst_48 = arith.constant 0.000000e+00 : f32
    %176 = vector.broadcast %cst_48 : f32 to vector<1x256xf32>
    %cst_49 = arith.constant 0.000000e+00 : f32
    %177 = vector.broadcast %cst_49 : f32 to vector<1x256xf32>
    %178 = vector.broadcast %2 : f32 to vector<1x256xf32>
    %179 = arith.mulf %178, %154 : vector<1x256xf32>
    %180 = arith.addf %177, %179 : vector<1x256xf32>
    %181 = vector.broadcast %27 : f32 to vector<1x256xf32>
    %182 = arith.mulf %181, %157 : vector<1x256xf32>
    %183 = arith.addf %180, %182 : vector<1x256xf32>
    %184 = vector.broadcast %7 : f32 to vector<1x256xf32>
    %185 = arith.mulf %184, %160 : vector<1x256xf32>
    %186 = arith.addf %183, %185 : vector<1x256xf32>
    %187 = vector.broadcast %32 : f32 to vector<1x256xf32>
    %188 = arith.mulf %187, %163 : vector<1x256xf32>
    %189 = arith.addf %186, %188 : vector<1x256xf32>
    %190 = vector.broadcast %12 : f32 to vector<1x256xf32>
    %191 = arith.mulf %190, %149 : vector<1x256xf32>
    %192 = arith.addf %189, %191 : vector<1x256xf32>
    %193 = vector.broadcast %37 : f32 to vector<1x256xf32>
    %194 = arith.mulf %193, %151 : vector<1x256xf32>
    %195 = arith.addf %192, %194 : vector<1x256xf32>
    %196 = vector.broadcast %17 : f32 to vector<1x256xf32>
    %197 = arith.mulf %196, %166 : vector<1x256xf32>
    %198 = arith.addf %195, %197 : vector<1x256xf32>
    %199 = vector.broadcast %42 : f32 to vector<1x256xf32>
    %200 = arith.mulf %199, %169 : vector<1x256xf32>
    %201 = arith.addf %198, %200 : vector<1x256xf32>
    %202 = vector.broadcast %22 : f32 to vector<1x256xf32>
    %203 = arith.mulf %202, %172 : vector<1x256xf32>
    %204 = arith.addf %201, %203 : vector<1x256xf32>
    %205 = vector.broadcast %47 : f32 to vector<1x256xf32>
    %206 = arith.mulf %205, %175 : vector<1x256xf32>
    %207 = arith.addf %204, %206 : vector<1x256xf32>
    %c2_i32_50 = arith.constant 2 : i32
    %208 = tpu.dynamic_rotate %207 by %c2_i32_50 dim 1 : vector<1x256xf32>, i32 -> vector<1x256xf32>
    %cst_51 = arith.constant 0.000000e+00 : f32
    %209 = vector.broadcast %cst_51 : f32 to vector<1x256xf32>
    %210 = arith.select %97, %208, %209 : vector<1x256xi1>, vector<1x256xf32>
    %211 = arith.addf %176, %210 : vector<1x256xf32>
    %cst_52 = arith.constant 0.000000e+00 : f32
    %212 = vector.broadcast %cst_52 : f32 to vector<1x256xf32>
    %213 = vector.broadcast %3 : f32 to vector<1x256xf32>
    %214 = arith.mulf %213, %154 : vector<1x256xf32>
    %215 = arith.addf %212, %214 : vector<1x256xf32>
    %216 = vector.broadcast %28 : f32 to vector<1x256xf32>
    %217 = arith.mulf %216, %157 : vector<1x256xf32>
    %218 = arith.addf %215, %217 : vector<1x256xf32>
    %219 = vector.broadcast %8 : f32 to vector<1x256xf32>
    %220 = arith.mulf %219, %160 : vector<1x256xf32>
    %221 = arith.addf %218, %220 : vector<1x256xf32>
    %222 = vector.broadcast %33 : f32 to vector<1x256xf32>
    %223 = arith.mulf %222, %163 : vector<1x256xf32>
    %224 = arith.addf %221, %223 : vector<1x256xf32>
    %225 = vector.broadcast %13 : f32 to vector<1x256xf32>
    %226 = arith.mulf %225, %149 : vector<1x256xf32>
    %227 = arith.addf %224, %226 : vector<1x256xf32>
    %228 = vector.broadcast %38 : f32 to vector<1x256xf32>
    %229 = arith.mulf %228, %151 : vector<1x256xf32>
    %230 = arith.addf %227, %229 : vector<1x256xf32>
    %231 = vector.broadcast %18 : f32 to vector<1x256xf32>
    %232 = arith.mulf %231, %166 : vector<1x256xf32>
    %233 = arith.addf %230, %232 : vector<1x256xf32>
    %234 = vector.broadcast %43 : f32 to vector<1x256xf32>
    %235 = arith.mulf %234, %169 : vector<1x256xf32>
    %236 = arith.addf %233, %235 : vector<1x256xf32>
    %237 = vector.broadcast %23 : f32 to vector<1x256xf32>
    %238 = arith.mulf %237, %172 : vector<1x256xf32>
    %239 = arith.addf %236, %238 : vector<1x256xf32>
    %240 = vector.broadcast %48 : f32 to vector<1x256xf32>
    %241 = arith.mulf %240, %175 : vector<1x256xf32>
    %242 = arith.addf %239, %241 : vector<1x256xf32>
    %c1_i32_53 = arith.constant 1 : i32
    %243 = tpu.dynamic_rotate %242 by %c1_i32_53 dim 1 : vector<1x256xf32>, i32 -> vector<1x256xf32>
    %cst_54 = arith.constant 0.000000e+00 : f32
    %244 = vector.broadcast %cst_54 : f32 to vector<1x256xf32>
    %245 = arith.select %106, %243, %244 : vector<1x256xi1>, vector<1x256xf32>
    %246 = arith.addf %211, %245 : vector<1x256xf32>
    %cst_55 = arith.constant 0.000000e+00 : f32
    %247 = vector.broadcast %cst_55 : f32 to vector<1x256xf32>
    %248 = vector.broadcast %4 : f32 to vector<1x256xf32>
    %249 = arith.mulf %248, %154 : vector<1x256xf32>
    %250 = arith.addf %247, %249 : vector<1x256xf32>
    %251 = vector.broadcast %29 : f32 to vector<1x256xf32>
    %252 = arith.mulf %251, %157 : vector<1x256xf32>
    %253 = arith.addf %250, %252 : vector<1x256xf32>
    %254 = vector.broadcast %9 : f32 to vector<1x256xf32>
    %255 = arith.mulf %254, %160 : vector<1x256xf32>
    %256 = arith.addf %253, %255 : vector<1x256xf32>
    %257 = vector.broadcast %34 : f32 to vector<1x256xf32>
    %258 = arith.mulf %257, %163 : vector<1x256xf32>
    %259 = arith.addf %256, %258 : vector<1x256xf32>
    %260 = vector.broadcast %14 : f32 to vector<1x256xf32>
    %261 = arith.mulf %260, %149 : vector<1x256xf32>
    %262 = arith.addf %259, %261 : vector<1x256xf32>
    %263 = vector.broadcast %39 : f32 to vector<1x256xf32>
    %264 = arith.mulf %263, %151 : vector<1x256xf32>
    %265 = arith.addf %262, %264 : vector<1x256xf32>
    %266 = vector.broadcast %19 : f32 to vector<1x256xf32>
    %267 = arith.mulf %266, %166 : vector<1x256xf32>
    %268 = arith.addf %265, %267 : vector<1x256xf32>
    %269 = vector.broadcast %44 : f32 to vector<1x256xf32>
    %270 = arith.mulf %269, %169 : vector<1x256xf32>
    %271 = arith.addf %268, %270 : vector<1x256xf32>
    %272 = vector.broadcast %24 : f32 to vector<1x256xf32>
    %273 = arith.mulf %272, %172 : vector<1x256xf32>
    %274 = arith.addf %271, %273 : vector<1x256xf32>
    %275 = vector.broadcast %49 : f32 to vector<1x256xf32>
    %276 = arith.mulf %275, %175 : vector<1x256xf32>
    %277 = arith.addf %274, %276 : vector<1x256xf32>
    %278 = arith.addf %246, %277 : vector<1x256xf32>
    %cst_56 = arith.constant 0.000000e+00 : f32
    %279 = vector.broadcast %cst_56 : f32 to vector<1x256xf32>
    %280 = vector.broadcast %5 : f32 to vector<1x256xf32>
    %281 = arith.mulf %280, %154 : vector<1x256xf32>
    %282 = arith.addf %279, %281 : vector<1x256xf32>
    %283 = vector.broadcast %30 : f32 to vector<1x256xf32>
    %284 = arith.mulf %283, %157 : vector<1x256xf32>
    %285 = arith.addf %282, %284 : vector<1x256xf32>
    %286 = vector.broadcast %10 : f32 to vector<1x256xf32>
    %287 = arith.mulf %286, %160 : vector<1x256xf32>
    %288 = arith.addf %285, %287 : vector<1x256xf32>
    %289 = vector.broadcast %35 : f32 to vector<1x256xf32>
    %290 = arith.mulf %289, %163 : vector<1x256xf32>
    %291 = arith.addf %288, %290 : vector<1x256xf32>
    %292 = vector.broadcast %15 : f32 to vector<1x256xf32>
    %293 = arith.mulf %292, %149 : vector<1x256xf32>
    %294 = arith.addf %291, %293 : vector<1x256xf32>
    %295 = vector.broadcast %40 : f32 to vector<1x256xf32>
    %296 = arith.mulf %295, %151 : vector<1x256xf32>
    %297 = arith.addf %294, %296 : vector<1x256xf32>
    %298 = vector.broadcast %20 : f32 to vector<1x256xf32>
    %299 = arith.mulf %298, %166 : vector<1x256xf32>
    %300 = arith.addf %297, %299 : vector<1x256xf32>
    %301 = vector.broadcast %45 : f32 to vector<1x256xf32>
    %302 = arith.mulf %301, %169 : vector<1x256xf32>
    %303 = arith.addf %300, %302 : vector<1x256xf32>
    %304 = vector.broadcast %25 : f32 to vector<1x256xf32>
    %305 = arith.mulf %304, %172 : vector<1x256xf32>
    %306 = arith.addf %303, %305 : vector<1x256xf32>
    %307 = vector.broadcast %50 : f32 to vector<1x256xf32>
    %308 = arith.mulf %307, %175 : vector<1x256xf32>
    %309 = arith.addf %306, %308 : vector<1x256xf32>
    %c255_i32 = arith.constant 255 : i32
    %310 = tpu.dynamic_rotate %309 by %c255_i32 dim 1 : vector<1x256xf32>, i32 -> vector<1x256xf32>
    %cst_57 = arith.constant 0.000000e+00 : f32
    %311 = vector.broadcast %cst_57 : f32 to vector<1x256xf32>
    %312 = arith.select %115, %310, %311 : vector<1x256xi1>, vector<1x256xf32>
    %313 = arith.addf %278, %312 : vector<1x256xf32>
    %cst_58 = arith.constant 0.000000e+00 : f32
    %314 = vector.broadcast %cst_58 : f32 to vector<1x256xf32>
    %315 = vector.broadcast %6 : f32 to vector<1x256xf32>
    %316 = arith.mulf %315, %154 : vector<1x256xf32>
    %317 = arith.addf %314, %316 : vector<1x256xf32>
    %318 = vector.broadcast %31 : f32 to vector<1x256xf32>
    %319 = arith.mulf %318, %157 : vector<1x256xf32>
    %320 = arith.addf %317, %319 : vector<1x256xf32>
    %321 = vector.broadcast %11 : f32 to vector<1x256xf32>
    %322 = arith.mulf %321, %160 : vector<1x256xf32>
    %323 = arith.addf %320, %322 : vector<1x256xf32>
    %324 = vector.broadcast %36 : f32 to vector<1x256xf32>
    %325 = arith.mulf %324, %163 : vector<1x256xf32>
    %326 = arith.addf %323, %325 : vector<1x256xf32>
    %327 = vector.broadcast %16 : f32 to vector<1x256xf32>
    %328 = arith.mulf %327, %149 : vector<1x256xf32>
    %329 = arith.addf %326, %328 : vector<1x256xf32>
    %330 = vector.broadcast %41 : f32 to vector<1x256xf32>
    %331 = arith.mulf %330, %151 : vector<1x256xf32>
    %332 = arith.addf %329, %331 : vector<1x256xf32>
    %333 = vector.broadcast %21 : f32 to vector<1x256xf32>
    %334 = arith.mulf %333, %166 : vector<1x256xf32>
    %335 = arith.addf %332, %334 : vector<1x256xf32>
    %336 = vector.broadcast %46 : f32 to vector<1x256xf32>
    %337 = arith.mulf %336, %169 : vector<1x256xf32>
    %338 = arith.addf %335, %337 : vector<1x256xf32>
    %339 = vector.broadcast %26 : f32 to vector<1x256xf32>
    %340 = arith.mulf %339, %172 : vector<1x256xf32>
    %341 = arith.addf %338, %340 : vector<1x256xf32>
    %342 = vector.broadcast %51 : f32 to vector<1x256xf32>
    %343 = arith.mulf %342, %175 : vector<1x256xf32>
    %344 = arith.addf %341, %343 : vector<1x256xf32>
    %c254_i32 = arith.constant 254 : i32
    %345 = tpu.dynamic_rotate %344 by %c254_i32 dim 1 : vector<1x256xf32>, i32 -> vector<1x256xf32>
    %cst_59 = arith.constant 0.000000e+00 : f32
    %346 = vector.broadcast %cst_59 : f32 to vector<1x256xf32>
    %347 = arith.select %124, %345, %346 : vector<1x256xi1>, vector<1x256xf32>
    %348 = arith.addf %313, %347 : vector<1x256xf32>
    %349 = arith.negf %348 : vector<1x256xf32>
    %350 = math.exp %349 : vector<1x256xf32>
    %cst_60 = arith.constant 1.000000e+00 : f32
    %351 = vector.broadcast %cst_60 : f32 to vector<1x256xf32>
    %352 = arith.addf %351, %350 : vector<1x256xf32>
    %353 = arith.divf %351, %352 : vector<1x256xf32>
    %c0_61 = arith.constant 0 : index
    %c0_62 = arith.constant 0 : index
    %c0_63 = arith.constant 0 : index
    %354 = vector.load %arg1[%c0_61, %c0_62, %c0_63] : memref<2x32x256xf32, #tpu.memory_space<vmem>>, vector<1x32x256xf32>
    %355 = vector.shape_cast %354 : vector<1x32x256xf32> to vector<32x256xf32>
    %356 = vector.broadcast %145 : vector<32x1xf32> to vector<32x256xf32>
    %357 = arith.mulf %355, %356 : vector<32x256xf32>
    %358 = vector.broadcast %353 : vector<1x256xf32> to vector<32x256xf32>
    %359 = arith.mulf %357, %358 : vector<32x256xf32>
    %360 = arith.addf %355, %359 : vector<32x256xf32>
    %c0_64 = arith.constant 0 : index
    %c0_65 = arith.constant 0 : index
    %c0_66 = arith.constant 0 : index
    %361 = vector.load %arg4[%c0_64, %c0_65, %c0_66] : memref<2x32x256xf32, #tpu.memory_space<vmem>>, vector<1x32x256xf32>
    %362 = vector.shape_cast %361 : vector<1x32x256xf32> to vector<32x256xf32>
    %363 = vector.shape_cast %360 : vector<32x256xf32> to vector<1x32x256xf32>
    tpu.vector_store %arg4[%c0_64, %c0_65, %c0_66], %363 {strides = array<i32>} : memref<2x32x256xf32, #tpu.memory_space<vmem>>, vector<1x32x256xf32>,
    %c1_67 = arith.constant 1 : index
    %c0_68 = arith.constant 0 : index
    %c0_69 = arith.constant 0 : index
    %364 = vector.load %arg1[%c1_67, %c0_68, %c0_69] : memref<2x32x256xf32, #tpu.memory_space<vmem>>, vector<1x32x256xf32>
    %365 = vector.shape_cast %364 : vector<1x32x256xf32> to vector<32x256xf32>
    %cst_70 = arith.constant dense<0.000000e+00> : vector<32xf32>
    %366 = vector.multi_reduction <add>, %365, %cst_70 [1] : vector<32x256xf32> to vector<32xf32>
    %367 = vector.shape_cast %366 : vector<32xf32> to vector<32x1xf32>
    %cst_71 = arith.constant 3.906250e-03 : f32
    %368 = vector.broadcast %cst_71 : f32 to vector<32x1xf32>
    %369 = arith.mulf %367, %368 : vector<32x1xf32>
    %370 = vector.broadcast %369 : vector<32x1xf32> to vector<32x2xf32>
    %371 = arith.mulf %0, %370 : vector<32x2xf32>
    %cst_72 = arith.constant dense<0.000000e+00> : vector<2xf32>
    %372 = vector.multi_reduction <add>, %371, %cst_72 [0] : vector<32x2xf32> to vector<2xf32>
    %373 = vector.shape_cast %372 : vector<2xf32> to vector<1x2xf32>
    %cst_73 = arith.constant 0.000000e+00 : f32
    %374 = vector.broadcast %cst_73 : f32 to vector<1x2xf32>
    %375 = arith.maximumf %373, %374 : vector<1x2xf32>
    %376 = vector.broadcast %375 : vector<1x2xf32> to vector<32x2xf32>
    %377 = arith.mulf %1, %376 : vector<32x2xf32>
    %cst_74 = arith.constant dense<0.000000e+00> : vector<32xf32>
    %378 = vector.multi_reduction <add>, %377, %cst_74 [1] : vector<32x2xf32> to vector<32xf32>
    %379 = vector.shape_cast %378 : vector<32xf32> to vector<32x1xf32>
    %380 = arith.negf %379 : vector<32x1xf32>
    %381 = math.exp %380 : vector<32x1xf32>
    %cst_75 = arith.constant 1.000000e+00 : f32
    %382 = vector.broadcast %cst_75 : f32 to vector<32x1xf32>
    %383 = arith.addf %382, %381 : vector<32x1xf32>
    %384 = arith.divf %382, %383 : vector<32x1xf32>
    %cst_76 = arith.constant dense<0.000000e+00> : vector<256xf32>
    %385 = vector.multi_reduction <add>, %365, %cst_76 [0] : vector<32x256xf32> to vector<256xf32>
    %386 = vector.shape_cast %385 : vector<256xf32> to vector<1x256xf32>
    %cst_77 = arith.constant 3.200000e+01 : f32
    %387 = vector.broadcast %cst_77 : f32 to vector<1x256xf32>
    %388 = arith.divf %386, %387 : vector<1x256xf32>
    %cst_78 = arith.constant dense<0xFF800000> : vector<256xf32>
    %389 = vector.multi_reduction <maximumf>, %365, %cst_78 [0] : vector<32x256xf32> to vector<256xf32>
    %390 = vector.shape_cast %389 : vector<256xf32> to vector<1x256xf32>
    %c32_i32_79 = arith.constant 32 : i32
    %391 = tpu.dynamic_rotate %388 by %c32_i32_79 dim 1 : vector<1x256xf32>, i32 -> vector<1x256xf32>
    %cst_80 = arith.constant 0.000000e+00 : f32
    %392 = vector.broadcast %cst_80 : f32 to vector<1x256xf32>
    %393 = arith.select %73, %391, %392 : vector<1x256xi1>, vector<1x256xf32>
    %c32_i32_81 = arith.constant 32 : i32
    %394 = tpu.dynamic_rotate %390 by %c32_i32_81 dim 1 : vector<1x256xf32>, i32 -> vector<1x256xf32>
    %cst_82 = arith.constant 0.000000e+00 : f32
    %395 = vector.broadcast %cst_82 : f32 to vector<1x256xf32>
    %396 = arith.select %73, %394, %395 : vector<1x256xi1>, vector<1x256xf32>
    %c16_i32_83 = arith.constant 16 : i32
    %397 = tpu.dynamic_rotate %388 by %c16_i32_83 dim 1 : vector<1x256xf32>, i32 -> vector<1x256xf32>
    %cst_84 = arith.constant 0.000000e+00 : f32
    %398 = vector.broadcast %cst_84 : f32 to vector<1x256xf32>
    %399 = arith.select %78, %397, %398 : vector<1x256xi1>, vector<1x256xf32>
    %c16_i32_85 = arith.constant 16 : i32
    %400 = tpu.dynamic_rotate %390 by %c16_i32_85 dim 1 : vector<1x256xf32>, i32 -> vector<1x256xf32>
    %cst_86 = arith.constant 0.000000e+00 : f32
    %401 = vector.broadcast %cst_86 : f32 to vector<1x256xf32>
    %402 = arith.select %78, %400, %401 : vector<1x256xi1>, vector<1x256xf32>
    %c240_i32_87 = arith.constant 240 : i32
    %403 = tpu.dynamic_rotate %388 by %c240_i32_87 dim 1 : vector<1x256xf32>, i32 -> vector<1x256xf32>
    %cst_88 = arith.constant 0.000000e+00 : f32
    %404 = vector.broadcast %cst_88 : f32 to vector<1x256xf32>
    %405 = arith.select %83, %403, %404 : vector<1x256xi1>, vector<1x256xf32>
    %c240_i32_89 = arith.constant 240 : i32
    %406 = tpu.dynamic_rotate %390 by %c240_i32_89 dim 1 : vector<1x256xf32>, i32 -> vector<1x256xf32>
    %cst_90 = arith.constant 0.000000e+00 : f32
    %407 = vector.broadcast %cst_90 : f32 to vector<1x256xf32>
    %408 = arith.select %83, %406, %407 : vector<1x256xi1>, vector<1x256xf32>
    %c224_i32_91 = arith.constant 224 : i32
    %409 = tpu.dynamic_rotate %388 by %c224_i32_91 dim 1 : vector<1x256xf32>, i32 -> vector<1x256xf32>
    %cst_92 = arith.constant 0.000000e+00 : f32
    %410 = vector.broadcast %cst_92 : f32 to vector<1x256xf32>
    %411 = arith.select %88, %409, %410 : vector<1x256xi1>, vector<1x256xf32>
    %c224_i32_93 = arith.constant 224 : i32
    %412 = tpu.dynamic_rotate %390 by %c224_i32_93 dim 1 : vector<1x256xf32>, i32 -> vector<1x256xf32>
    %cst_94 = arith.constant 0.000000e+00 : f32
    %413 = vector.broadcast %cst_94 : f32 to vector<1x256xf32>
    %414 = arith.select %88, %412, %413 : vector<1x256xi1>, vector<1x256xf32>
    %cst_95 = arith.constant 0.000000e+00 : f32
    %415 = vector.broadcast %cst_95 : f32 to vector<1x256xf32>
    %cst_96 = arith.constant 0.000000e+00 : f32
    %416 = vector.broadcast %cst_96 : f32 to vector<1x256xf32>
    %417 = vector.broadcast %2 : f32 to vector<1x256xf32>
    %418 = arith.mulf %417, %393 : vector<1x256xf32>
    %419 = arith.addf %416, %418 : vector<1x256xf32>
    %420 = vector.broadcast %27 : f32 to vector<1x256xf32>
    %421 = arith.mulf %420, %396 : vector<1x256xf32>
    %422 = arith.addf %419, %421 : vector<1x256xf32>
    %423 = vector.broadcast %7 : f32 to vector<1x256xf32>
    %424 = arith.mulf %423, %399 : vector<1x256xf32>
    %425 = arith.addf %422, %424 : vector<1x256xf32>
    %426 = vector.broadcast %32 : f32 to vector<1x256xf32>
    %427 = arith.mulf %426, %402 : vector<1x256xf32>
    %428 = arith.addf %425, %427 : vector<1x256xf32>
    %429 = vector.broadcast %12 : f32 to vector<1x256xf32>
    %430 = arith.mulf %429, %388 : vector<1x256xf32>
    %431 = arith.addf %428, %430 : vector<1x256xf32>
    %432 = vector.broadcast %37 : f32 to vector<1x256xf32>
    %433 = arith.mulf %432, %390 : vector<1x256xf32>
    %434 = arith.addf %431, %433 : vector<1x256xf32>
    %435 = vector.broadcast %17 : f32 to vector<1x256xf32>
    %436 = arith.mulf %435, %405 : vector<1x256xf32>
    %437 = arith.addf %434, %436 : vector<1x256xf32>
    %438 = vector.broadcast %42 : f32 to vector<1x256xf32>
    %439 = arith.mulf %438, %408 : vector<1x256xf32>
    %440 = arith.addf %437, %439 : vector<1x256xf32>
    %441 = vector.broadcast %22 : f32 to vector<1x256xf32>
    %442 = arith.mulf %441, %411 : vector<1x256xf32>
    %443 = arith.addf %440, %442 : vector<1x256xf32>
    %444 = vector.broadcast %47 : f32 to vector<1x256xf32>
    %445 = arith.mulf %444, %414 : vector<1x256xf32>
    %446 = arith.addf %443, %445 : vector<1x256xf32>
    %c2_i32_97 = arith.constant 2 : i32
    %447 = tpu.dynamic_rotate %446 by %c2_i32_97 dim 1 : vector<1x256xf32>, i32 -> vector<1x256xf32>
    %cst_98 = arith.constant 0.000000e+00 : f32
    %448 = vector.broadcast %cst_98 : f32 to vector<1x256xf32>
    %449 = arith.select %97, %447, %448 : vector<1x256xi1>, vector<1x256xf32>
    %450 = arith.addf %415, %449 : vector<1x256xf32>
    %cst_99 = arith.constant 0.000000e+00 : f32
    %451 = vector.broadcast %cst_99 : f32 to vector<1x256xf32>
    %452 = vector.broadcast %3 : f32 to vector<1x256xf32>
    %453 = arith.mulf %452, %393 : vector<1x256xf32>
    %454 = arith.addf %451, %453 : vector<1x256xf32>
    %455 = vector.broadcast %28 : f32 to vector<1x256xf32>
    %456 = arith.mulf %455, %396 : vector<1x256xf32>
    %457 = arith.addf %454, %456 : vector<1x256xf32>
    %458 = vector.broadcast %8 : f32 to vector<1x256xf32>
    %459 = arith.mulf %458, %399 : vector<1x256xf32>
    %460 = arith.addf %457, %459 : vector<1x256xf32>
    %461 = vector.broadcast %33 : f32 to vector<1x256xf32>
    %462 = arith.mulf %461, %402 : vector<1x256xf32>
    %463 = arith.addf %460, %462 : vector<1x256xf32>
    %464 = vector.broadcast %13 : f32 to vector<1x256xf32>
    %465 = arith.mulf %464, %388 : vector<1x256xf32>
    %466 = arith.addf %463, %465 : vector<1x256xf32>
    %467 = vector.broadcast %38 : f32 to vector<1x256xf32>
    %468 = arith.mulf %467, %390 : vector<1x256xf32>
    %469 = arith.addf %466, %468 : vector<1x256xf32>
    %470 = vector.broadcast %18 : f32 to vector<1x256xf32>
    %471 = arith.mulf %470, %405 : vector<1x256xf32>
    %472 = arith.addf %469, %471 : vector<1x256xf32>
    %473 = vector.broadcast %43 : f32 to vector<1x256xf32>
    %474 = arith.mulf %473, %408 : vector<1x256xf32>
    %475 = arith.addf %472, %474 : vector<1x256xf32>
    %476 = vector.broadcast %23 : f32 to vector<1x256xf32>
    %477 = arith.mulf %476, %411 : vector<1x256xf32>
    %478 = arith.addf %475, %477 : vector<1x256xf32>
    %479 = vector.broadcast %48 : f32 to vector<1x256xf32>
    %480 = arith.mulf %479, %414 : vector<1x256xf32>
    %481 = arith.addf %478, %480 : vector<1x256xf32>
    %c1_i32_100 = arith.constant 1 : i32
    %482 = tpu.dynamic_rotate %481 by %c1_i32_100 dim 1 : vector<1x256xf32>, i32 -> vector<1x256xf32>
    %cst_101 = arith.constant 0.000000e+00 : f32
    %483 = vector.broadcast %cst_101 : f32 to vector<1x256xf32>
    %484 = arith.select %106, %482, %483 : vector<1x256xi1>, vector<1x256xf32>
    %485 = arith.addf %450, %484 : vector<1x256xf32>
    %cst_102 = arith.constant 0.000000e+00 : f32
    %486 = vector.broadcast %cst_102 : f32 to vector<1x256xf32>
    %487 = vector.broadcast %4 : f32 to vector<1x256xf32>
    %488 = arith.mulf %487, %393 : vector<1x256xf32>
    %489 = arith.addf %486, %488 : vector<1x256xf32>
    %490 = vector.broadcast %29 : f32 to vector<1x256xf32>
    %491 = arith.mulf %490, %396 : vector<1x256xf32>
    %492 = arith.addf %489, %491 : vector<1x256xf32>
    %493 = vector.broadcast %9 : f32 to vector<1x256xf32>
    %494 = arith.mulf %493, %399 : vector<1x256xf32>
    %495 = arith.addf %492, %494 : vector<1x256xf32>
    %496 = vector.broadcast %34 : f32 to vector<1x256xf32>
    %497 = arith.mulf %496, %402 : vector<1x256xf32>
    %498 = arith.addf %495, %497 : vector<1x256xf32>
    %499 = vector.broadcast %14 : f32 to vector<1x256xf32>
    %500 = arith.mulf %499, %388 : vector<1x256xf32>
    %501 = arith.addf %498, %500 : vector<1x256xf32>
    %502 = vector.broadcast %39 : f32 to vector<1x256xf32>
    %503 = arith.mulf %502, %390 : vector<1x256xf32>
    %504 = arith.addf %501, %503 : vector<1x256xf32>
    %505 = vector.broadcast %19 : f32 to vector<1x256xf32>
    %506 = arith.mulf %505, %405 : vector<1x256xf32>
    %507 = arith.addf %504, %506 : vector<1x256xf32>
    %508 = vector.broadcast %44 : f32 to vector<1x256xf32>
    %509 = arith.mulf %508, %408 : vector<1x256xf32>
    %510 = arith.addf %507, %509 : vector<1x256xf32>
    %511 = vector.broadcast %24 : f32 to vector<1x256xf32>
    %512 = arith.mulf %511, %411 : vector<1x256xf32>
    %513 = arith.addf %510, %512 : vector<1x256xf32>
    %514 = vector.broadcast %49 : f32 to vector<1x256xf32>
    %515 = arith.mulf %514, %414 : vector<1x256xf32>
    %516 = arith.addf %513, %515 : vector<1x256xf32>
    %517 = arith.addf %485, %516 : vector<1x256xf32>
    %cst_103 = arith.constant 0.000000e+00 : f32
    %518 = vector.broadcast %cst_103 : f32 to vector<1x256xf32>
    %519 = vector.broadcast %5 : f32 to vector<1x256xf32>
    %520 = arith.mulf %519, %393 : vector<1x256xf32>
    %521 = arith.addf %518, %520 : vector<1x256xf32>
    %522 = vector.broadcast %30 : f32 to vector<1x256xf32>
    %523 = arith.mulf %522, %396 : vector<1x256xf32>
    %524 = arith.addf %521, %523 : vector<1x256xf32>
    %525 = vector.broadcast %10 : f32 to vector<1x256xf32>
    %526 = arith.mulf %525, %399 : vector<1x256xf32>
    %527 = arith.addf %524, %526 : vector<1x256xf32>
    %528 = vector.broadcast %35 : f32 to vector<1x256xf32>
    %529 = arith.mulf %528, %402 : vector<1x256xf32>
    %530 = arith.addf %527, %529 : vector<1x256xf32>
    %531 = vector.broadcast %15 : f32 to vector<1x256xf32>
    %532 = arith.mulf %531, %388 : vector<1x256xf32>
    %533 = arith.addf %530, %532 : vector<1x256xf32>
    %534 = vector.broadcast %40 : f32 to vector<1x256xf32>
    %535 = arith.mulf %534, %390 : vector<1x256xf32>
    %536 = arith.addf %533, %535 : vector<1x256xf32>
    %537 = vector.broadcast %20 : f32 to vector<1x256xf32>
    %538 = arith.mulf %537, %405 : vector<1x256xf32>
    %539 = arith.addf %536, %538 : vector<1x256xf32>
    %540 = vector.broadcast %45 : f32 to vector<1x256xf32>
    %541 = arith.mulf %540, %408 : vector<1x256xf32>
    %542 = arith.addf %539, %541 : vector<1x256xf32>
    %543 = vector.broadcast %25 : f32 to vector<1x256xf32>
    %544 = arith.mulf %543, %411 : vector<1x256xf32>
    %545 = arith.addf %542, %544 : vector<1x256xf32>
    %546 = vector.broadcast %50 : f32 to vector<1x256xf32>
    %547 = arith.mulf %546, %414 : vector<1x256xf32>
    %548 = arith.addf %545, %547 : vector<1x256xf32>
    %c255_i32_104 = arith.constant 255 : i32
    %549 = tpu.dynamic_rotate %548 by %c255_i32_104 dim 1 : vector<1x256xf32>, i32 -> vector<1x256xf32>
    %cst_105 = arith.constant 0.000000e+00 : f32
    %550 = vector.broadcast %cst_105 : f32 to vector<1x256xf32>
    %551 = arith.select %115, %549, %550 : vector<1x256xi1>, vector<1x256xf32>
    %552 = arith.addf %517, %551 : vector<1x256xf32>
    %cst_106 = arith.constant 0.000000e+00 : f32
    %553 = vector.broadcast %cst_106 : f32 to vector<1x256xf32>
    %554 = vector.broadcast %6 : f32 to vector<1x256xf32>
    %555 = arith.mulf %554, %393 : vector<1x256xf32>
    %556 = arith.addf %553, %555 : vector<1x256xf32>
    %557 = vector.broadcast %31 : f32 to vector<1x256xf32>
    %558 = arith.mulf %557, %396 : vector<1x256xf32>
    %559 = arith.addf %556, %558 : vector<1x256xf32>
    %560 = vector.broadcast %11 : f32 to vector<1x256xf32>
    %561 = arith.mulf %560, %399 : vector<1x256xf32>
    %562 = arith.addf %559, %561 : vector<1x256xf32>
    %563 = vector.broadcast %36 : f32 to vector<1x256xf32>
    %564 = arith.mulf %563, %402 : vector<1x256xf32>
    %565 = arith.addf %562, %564 : vector<1x256xf32>
    %566 = vector.broadcast %16 : f32 to vector<1x256xf32>
    %567 = arith.mulf %566, %388 : vector<1x256xf32>
    %568 = arith.addf %565, %567 : vector<1x256xf32>
    %569 = vector.broadcast %41 : f32 to vector<1x256xf32>
    %570 = arith.mulf %569, %390 : vector<1x256xf32>
    %571 = arith.addf %568, %570 : vector<1x256xf32>
    %572 = vector.broadcast %21 : f32 to vector<1x256xf32>
    %573 = arith.mulf %572, %405 : vector<1x256xf32>
    %574 = arith.addf %571, %573 : vector<1x256xf32>
    %575 = vector.broadcast %46 : f32 to vector<1x256xf32>
    %576 = arith.mulf %575, %408 : vector<1x256xf32>
    %577 = arith.addf %574, %576 : vector<1x256xf32>
    %578 = vector.broadcast %26 : f32 to vector<1x256xf32>
    %579 = arith.mulf %578, %411 : vector<1x256xf32>
    %580 = arith.addf %577, %579 : vector<1x256xf32>
    %581 = vector.broadcast %51 : f32 to vector<1x256xf32>
    %582 = arith.mulf %581, %414 : vector<1x256xf32>
    %583 = arith.addf %580, %582 : vector<1x256xf32>
    %c254_i32_107 = arith.constant 254 : i32
    %584 = tpu.dynamic_rotate %583 by %c254_i32_107 dim 1 : vector<1x256xf32>, i32 -> vector<1x256xf32>
    %cst_108 = arith.constant 0.000000e+00 : f32
    %585 = vector.broadcast %cst_108 : f32 to vector<1x256xf32>
    %586 = arith.select %124, %584, %585 : vector<1x256xi1>, vector<1x256xf32>
    %587 = arith.addf %552, %586 : vector<1x256xf32>
    %588 = arith.negf %587 : vector<1x256xf32>
    %589 = math.exp %588 : vector<1x256xf32>
    %cst_109 = arith.constant 1.000000e+00 : f32
    %590 = vector.broadcast %cst_109 : f32 to vector<1x256xf32>
    %591 = arith.addf %590, %589 : vector<1x256xf32>
    %592 = arith.divf %590, %591 : vector<1x256xf32>
    %c1_110 = arith.constant 1 : index
    %c0_111 = arith.constant 0 : index
    %c0_112 = arith.constant 0 : index
    %593 = vector.load %arg1[%c1_110, %c0_111, %c0_112] : memref<2x32x256xf32, #tpu.memory_space<vmem>>, vector<1x32x256xf32>
    %594 = vector.shape_cast %593 : vector<1x32x256xf32> to vector<32x256xf32>
    %595 = vector.broadcast %384 : vector<32x1xf32> to vector<32x256xf32>
    %596 = arith.mulf %594, %595 : vector<32x256xf32>
    %597 = vector.broadcast %592 : vector<1x256xf32> to vector<32x256xf32>
    %598 = arith.mulf %596, %597 : vector<32x256xf32>
    %599 = arith.addf %594, %598 : vector<32x256xf32>
    %c1_113 = arith.constant 1 : index
    %c0_114 = arith.constant 0 : index
    %c0_115 = arith.constant 0 : index
    %600 = vector.load %arg4[%c1_113, %c0_114, %c0_115] : memref<2x32x256xf32, #tpu.memory_space<vmem>>, vector<1x32x256xf32>
    %601 = vector.shape_cast %600 : vector<1x32x256xf32> to vector<32x256xf32>
    %602 = vector.shape_cast %599 : vector<32x256xf32> to vector<1x32x256xf32>
    tpu.vector_store %arg4[%c1_113, %c0_114, %c0_115], %602 {strides = array<i32>} : memref<2x32x256xf32, #tpu.memory_space<vmem>>, vector<1x32x256xf32>,
    return
  }
  func.func @transform_0(%arg0: i32) -> (i32, i32, i32) {
    %c0_i32 = arith.constant 0 : i32
    %c0_i32_0 = arith.constant 0 : i32
    %c0_i32_1 = arith.constant 0 : i32
    return %arg0, %c0_i32, %c0_i32_0 : i32, i32, i32
  }
  func.func @transform_1(%arg0: i32) -> (i32, i32) {
    %c0_i32 = arith.constant 0 : i32
    %c0_i32_0 = arith.constant 0 : i32
    %c0_i32_1 = arith.constant 0 : i32
    return %c0_i32, %c0_i32_0 : i32, i32
  }
  func.func @transform_2(%arg0: i32) -> i32 {
    %c0_i32 = arith.constant 0 : i32
    %c0_i32_0 = arith.constant 0 : i32
    return %c0_i32 : i32
  }
  func.func @transform_3(%arg0: i32) -> (i32, i32, i32) {
    %c0_i32 = arith.constant 0 : i32
    %c0_i32_0 = arith.constant 0 : i32
    %c0_i32_1 = arith.constant 0 : i32
    return %arg0, %c0_i32, %c0_i32_0 : i32, i32, i32
  }
}

</mosaic_0001>

<llo_original>
// kernel: tpu_custom_call.1
$region0: #{tpu_custom_call.1}
  #allocation0 [shape = 'u32[]', space=smem, size = 0x4, offset = 0x4, fixed_abs, tag = 'smem constant byte address 0x4 - core index']
  #allocation1 [shape = 'u32[144,128]{1,0:T(1,128)}', space=vmem, size = 0x12000, scoped, tag = 'internal scratch']
  %s0 = inlined_call_operand.hbm [shape: f32[2,32,256], index: 0, kind: input, shape index: {}]
  %s1 = inlined_call_operand.vmem [shape: f32[64,2], index: 1, kind: input, shape index: {}]
  %s2 = inlined_call_operand.vmem [shape: f32[50], index: 2, kind: input, shape index: {}]
  %s3 = inlined_call_operand.hbm [shape: f32[2,32,256], index: 3, kind: output, shape index: {}]
  %s4 = sld [smem:[#allocation0]]
  $region30: #{tpu_custom_call.1} parent=0
    _
  %s6 = ssub.s32 1, %s4
  %s7 = scalar_select 0, %s6, %s4
  $region1: #{tpu_custom_call.1} parent=0
    #allocation2 [shape = 'u8[65536]{0}', space=vmem, size = 0x10000, scoped, tag = 'input window, operand 0, single buffered']
    #allocation3 [shape = 's32[1]{0}', space=sflag, size = 0x4, scoped, tag = 'scoped memory for tpu_custom_call.1']
    #allocation4 [shape = 's32[1]{0}', space=sflag, size = 0x4, scoped, tag = 'scoped memory for tpu_custom_call.1']
    #allocation5 [shape = 's32[1]{0}', space=sflag, size = 0x4, scoped, tag = 'scoped memory for tpu_custom_call.1']
    #allocation6 [shape = 'u8[512]{0}', space=smem, size = 0x200, scoped, tag = 'input window, operand 2, single buffered']
    #allocation7 [shape = 'u8[65536]{0}', space=vmem, size = 0x10000, scoped, tag = 'output window, operand 0, single buffered']
    %8 = vsyncpa [#allocation3], 0
    %9 = vsyncpa [#allocation5], 0
    %10 = vsyncpa [#allocation4], 0
    // Predicated region
    $region2: #{tpu_custom_call.1} parent=1 // pred_check
      _
    $region3: #{tpu_custom_call.1} parent=1 // pred_check_branch
      %12 = sbr.rel (0) target = $region5
    $region4: #{tpu_custom_call.1} parent=1 // pred_region
      %s14 = ssub.s32 2048, 2048
      %15 = vsyncadd [#allocation3], %s14
      %s16 = sshll.u32 [#allocation2], 4
      %s17 = int_to_ptr.vmem [resolvable:$true] %s16
      %22 = dma.hbm_to_vmem [thread:$0]  %s0, 2048, %s17, [#allocation3], 256, 256, 16
    $region5: #{tpu_custom_call.1} parent=1 // pred_fallthru
      _
    // Predicated region
    $region6: #{tpu_custom_call.1} parent=1 // pred_check
      _
    $region7: #{tpu_custom_call.1} parent=1 // pred_check_branch
      %24 = sbr.rel (0) target = $region9
    $region8: #{tpu_custom_call.1} parent=1 // pred_region
      _
    $region9: #{tpu_custom_call.1} parent=1 // pred_fallthru
      _
    // Predicated region
    $region10: #{tpu_custom_call.1} parent=1 // pred_check
      _
    $region11: #{tpu_custom_call.1} parent=1 // pred_check_branch
      %26 = sbr.rel (0) target = $region13
    $region12: #{tpu_custom_call.1} parent=1 // pred_region
      %s28 = ssub.s32 16, 16
      %29 = vsyncadd [#allocation5], %s28
      %s31 = sshll.u32 %s2, 4
      %s32 = int_to_ptr.vmem [resolvable:$true] %s31
      %34 = dma.vmem_to_smem %s32, 16, [#allocation6], [#allocation5]
    $region13: #{tpu_custom_call.1} parent=1 // pred_fallthru
      _
    // Predicated region
    $region14: #{tpu_custom_call.1} parent=1 // pred_check
      _
    $region15: #{tpu_custom_call.1} parent=1 // pred_check_branch
      %36 = sbr.rel (0) target = $region17
    $region16: #{tpu_custom_call.1} parent=1 // pred_region
      %37 = dma.done [#allocation3], 2048
    $region17: #{tpu_custom_call.1} parent=1 // pred_fallthru
      _
    // Predicated region
    $region18: #{tpu_custom_call.1} parent=1 // pred_check
      _
    $region19: #{tpu_custom_call.1} parent=1 // pred_check_branch
      %39 = sbr.rel (0) target = $region21
    $region20: #{tpu_custom_call.1} parent=1 // pred_region
      %40 = dma.done [#allocation5], 16
    $region21: #{tpu_custom_call.1} parent=1 // pred_fallthru
      _
    %41 = sfence
    %v42 = vld [vmem:[%s1] sm:$0xff]
    %v43 = vld [vmem:[%s1 + $0x8] sm:$0xff]
    %v44 = vld [vmem:[%s1 + $0x10] sm:$0xff]
    %v45 = vld [vmem:[%s1 + $0x18] sm:$0xff]
    %v46 = vld [vmem:[%s1 + $0x20] sm:$0xff]
    %v47 = vld [vmem:[%s1 + $0x28] sm:$0xff]
    %v48 = vld [vmem:[%s1 + $0x30] sm:$0xff]
    %v49 = vld [vmem:[%s1 + $0x38] sm:$0xff]
    %s50 = sld [smem:[#allocation6]]
    %s51 = sld [smem:[#allocation6 + $0x1]]
    %s52 = sld [smem:[#allocation6 + $0x2]]
    %s53 = sld [smem:[#allocation6 + $0x3]]
    %s54 = sld [smem:[#allocation6 + $0x4]]
    %s55 = sld [smem:[#allocation6 + $0x5]]
    %s56 = sld [smem:[#allocation6 + $0x6]]
    %s57 = sld [smem:[#allocation6 + $0x7]]
    %s58 = sld [smem:[#allocation6 + $0x8]]
    %s59 = sld [smem:[#allocation6 + $0x9]]
    %s60 = sld [smem:[#allocation6 + $0xa]]
    %s61 = sld [smem:[#allocation6 + $0xb]]
    %s62 = sld [smem:[#allocation6 + $0xc]]
    %s63 = sld [smem:[#allocation6 + $0xd]]
    %s64 = sld [smem:[#allocation6 + $0xe]]
    %s65 = sld [smem:[#allocation6 + $0xf]]
    %s66 = sld [smem:[#allocation6 + $0x10]]
    %s67 = sld [smem:[#allocation6 + $0x11]]
    %s68 = sld [smem:[#allocation6 + $0x12]]
    %s69 = sld [smem:[#allocation6 + $0x13]]
    %s70 = sld [smem:[#allocation6 + $0x14]]
    %s71 = sld [smem:[#allocation6 + $0x15]]
    %s72 = sld [smem:[#allocation6 + $0x16]]
    %s73 = sld [smem:[#allocation6 + $0x17]]
    %s74 = sld [smem:[#allocation6 + $0x18]]
    %s75 = sld [smem:[#allocation6 + $0x19]]
    %s76 = sld [smem:[#allocation6 + $0x1a]]
    %s77 = sld [smem:[#allocation6 + $0x1b]]
    %s78 = sld [smem:[#allocation6 + $0x1c]]
    %s79 = sld [smem:[#allocation6 + $0x1d]]
    %s80 = sld [smem:[#allocation6 + $0x1e]]
    %s81 = sld [smem:[#allocation6 + $0x1f]]
    %s82 = sld [smem:[#allocation6 + $0x20]]
    %s83 = sld [smem:[#allocation6 + $0x21]]
    %s84 = sld [smem:[#allocation6 + $0x22]]
    %s85 = sld [smem:[#allocation6 + $0x23]]
    %s86 = sld [smem:[#allocation6 + $0x24]]
    %s87 = sld [smem:[#allocation6 + $0x25]]
    %s88 = sld [smem:[#allocation6 + $0x26]]
    %s89 = sld [smem:[#allocation6 + $0x27]]
    %s90 = sld [smem:[#allocation6 + $0x28]]
    %s91 = sld [smem:[#allocation6 + $0x29]]
    %s92 = sld [smem:[#allocation6 + $0x2a]]
    %s93 = sld [smem:[#allocation6 + $0x2b]]
    %s94 = sld [smem:[#allocation6 + $0x2c]]
    %s95 = sld [smem:[#allocation6 + $0x2d]]
    %s96 = sld [smem:[#allocation6 + $0x2e]]
    %s97 = sld [smem:[#allocation6 + $0x2f]]
    %s98 = sld [smem:[#allocation6 + $0x30]]
    %s99 = sld [smem:[#allocation6 + $0x31]]
    %v100 = vlaneseq
    %v101 = vand.u32 %v100, 127
    %v102 = vadd.s32 %v101, 128
    %vm103 = vcmp.lt.s32.totalorder %v101, 0
    %v104 = vsub.s32 0, %v101
    %v105 = vsel %vm103, %v104, %v101
    %v106 = vshrl.u32 %v105, 4
    %v107 = vand.u32 %v105, 15
    %v108 = vsub.s32 0, %v107
    %v109 = vsel %vm103, %v108, %v107
    %vm110 = vcmp.lt.s32.totalorder %v102, 0
    %v111 = vsub.s32 0, %v102
    %v112 = vsel %vm110, %v111, %v102
    %v113 = vshrl.u32 %v112, 4
    %v114 = vand.u32 %v112, 15
    %v115 = vsub.s32 0, %v114
    %v116 = vsel %vm110, %v115, %v114
    %vm117 = vcmp.ne.s32.totalorder %v109, 0
    %vm118 = vcmp.ne.s32.totalorder %v116, 0
    %vm119 = vcmp.lt.s32.totalorder %v109, 0
    %vm120 = vcmp.lt.s32.totalorder %v116, 0
    %vm121 = vmand %vm119, %vm117
    %vm122 = vmand %vm120, %vm118
    %v123 = vadd.s32 %v109, 16
    %v124 = vadd.s32 %v116, 16
    %v125 = vsel %vm121, %v123, %v109
    %v126 = vsel %vm122, %v124, %v116
    %vm127 = vcmp.ge.s32.totalorder %v101, 32
    %vm128 = vcmp.ge.s32.totalorder %v102, 32
    %vm129 = vcmp.lt.s32.totalorder %v101, 288
    %vm130 = vcmp.lt.s32.totalorder %v102, 288
    %vm131 = vmand %vm127, %vm129
    %vm132 = vmand %vm128, %vm130
    %vm133 = vcmp.ge.s32.totalorder %v101, 16
    %vm134 = vcmp.ge.s32.totalorder %v102, 16
    %vm135 = vcmp.lt.s32.totalorder %v101, 272
    %vm136 = vcmp.lt.s32.totalorder %v102, 272
    %vm137 = vmand %vm133, %vm135
    %vm138 = vmand %vm134, %vm136
    %vm139 = vcmp.ge.s32.totalorder %v101, 4294967280
    %vm140 = vcmp.ge.s32.totalorder %v102, 4294967280
    %vm141 = vcmp.lt.s32.totalorder %v101, 240
    %vm142 = vcmp.lt.s32.totalorder %v102, 240
    %vm143 = vmand %vm139, %vm141
    %vm144 = vmand %vm140, %vm142
    %vm145 = vcmp.ge.s32.totalorder %v101, 4294967264
    %vm146 = vcmp.ge.s32.totalorder %v102, 4294967264
    %vm147 = vcmp.lt.s32.totalorder %v101, 224
    %vm148 = vcmp.lt.s32.totalorder %v102, 224
    %vm149 = vmand %vm145, %vm147
    %vm150 = vmand %vm146, %vm148
    %v151 = vadd.s32 %v125, 4294967294
    %v152 = vadd.s32 %v126, 4294967294
    %vm153 = vcmp.ge.s32.totalorder %v151, 0
    %vm154 = vcmp.ge.s32.totalorder %v152, 0
    %vm155 = vcmp.lt.s32.totalorder %v151, 16
    %vm156 = vcmp.lt.s32.totalorder %v152, 16
    %vm157 = vmand %vm153, %vm155
    %vm158 = vmand %vm154, %vm156
    %v159 = vadd.s32 %v125, 4294967295
    %v160 = vadd.s32 %v126, 4294967295
    %vm161 = vcmp.ge.s32.totalorder %v159, 0
    %vm162 = vcmp.ge.s32.totalorder %v160, 0
    %vm163 = vcmp.lt.s32.totalorder %v159, 16
    %vm164 = vcmp.lt.s32.totalorder %v160, 16
    %vm165 = vmand %vm161, %vm163
    %vm166 = vmand %vm162, %vm164
    %v167 = vadd.s32 %v125, 1
    %v168 = vadd.s32 %v126, 1
    %vm169 = vcmp.ge.s32.totalorder %v167, 0
    %vm170 = vcmp.ge.s32.totalorder %v168, 0
    %vm171 = vcmp.lt.s32.totalorder %v167, 16
    %vm172 = vcmp.lt.s32.totalorder %v168, 16
    %vm173 = vmand %vm169, %vm171
    %vm174 = vmand %vm170, %vm172
    %v175 = vadd.s32 %v125, 2
    %v176 = vadd.s32 %v126, 2
    %vm177 = vcmp.ge.s32.totalorder %v175, 0
    %vm178 = vcmp.ge.s32.totalorder %v176, 0
    %vm179 = vcmp.lt.s32.totalorder %v175, 16
    %vm180 = vcmp.lt.s32.totalorder %v176, 16
    %vm181 = vmand %vm177, %vm179
    %vm182 = vmand %vm178, %vm180
    %v183 = vld [vmem:[#allocation2] sm:$0xff]
    %v184 = vld [vmem:[#allocation2 + $0x8] sm:$0xff]
    %v185 = vld [vmem:[#allocation2 + $0x10] sm:$0xff]
    %v186 = vld [vmem:[#allocation2 + $0x18] sm:$0xff]
    %v187 = vld [vmem:[#allocation2 + $0x20] sm:$0xff]
    %v188 = vld [vmem:[#allocation2 + $0x28] sm:$0xff]
    %v189 = vld [vmem:[#allocation2 + $0x30] sm:$0xff]
    %v190 = vld [vmem:[#allocation2 + $0x38] sm:$0xff]
    %v191 = vadd.f32 %v183, %v184
    %192 = vadd.xlane.f32.xlu0 %v191
    %v193 = vpop.xlane.xlu0 %192
    %v194 = vadd.f32 %v185, %v186
    %195 = vadd.xlane.f32.xlu0 %v194
    %v196 = vpop.xlane.xlu0 %195
    %v197 = vadd.f32 %v187, %v188
    %198 = vadd.xlane.f32.xlu0 %v197
    %v199 = vpop.xlane.xlu0 %198
    %v200 = vadd.f32 %v189, %v190
    %201 = vadd.xlane.f32.xlu0 %v200
    %v202 = vpop.xlane.xlu0 %201
    %v203 = vmul.f32 %v193, 0.00390625
    %v204 = vmul.f32 %v196, 0.00390625
    %v205 = vmul.f32 %v199, 0.00390625
    %v206 = vmul.f32 %v202, 0.00390625
    %v207 = vmul.f32 %v42, %v203
    %v208 = vmul.f32 %v43, %v204
    %v209 = vmul.f32 %v44, %v205
    %v210 = vmul.f32 %v45, %v206
    %vm211 = vcmask 15360
    %v212 = vsel %vm211, %v207, 0.0
    %v213 = vsel %vm211, %v208, 0.0
    %v214 = vadd.f32 %v212, %v213
    %v215 = vsel %vm211, %v209, 0.0
    %v216 = vadd.f32 %v214, %v215
    %v217 = vsel %vm211, %v210, 0.0
    %v218 = vadd.f32 %v216, %v217
    %v219 = vrot.slane %v218, 4
    %v220 = vadd.f32 %v218, %v219
    %v221 = vrot.slane %v220, 2
    %v222 = vadd.f32 %v220, %v221
    %v223 = vrot.slane %v222, 1
    %v224 = vadd.f32 %v222, %v223
    %v225 = vmax.f32 %v224, 0.0
    %v226 = vmul.f32 %v46, %v225
    %v227 = vmul.f32 %v47, %v225
    %v228 = vmul.f32 %v48, %v225
    %v229 = vmul.f32 %v49, %v225
    %v230 = vsel %vm211, %v226, 0.0
    %231 = vadd.xlane.f32.xlu0 %v230
    %v232 = vpop.xlane.xlu0 %231
    %v233 = vsel %vm211, %v227, 0.0
    %234 = vadd.xlane.f32.xlu0 %v233
    %v235 = vpop.xlane.xlu0 %234
    %v236 = vsel %vm211, %v228, 0.0
    %237 = vadd.xlane.f32.xlu0 %v236
    %v238 = vpop.xlane.xlu0 %237
    %v239 = vsel %vm211, %v229, 0.0
    %240 = vadd.xlane.f32.xlu0 %v239
    %v241 = vpop.xlane.xlu0 %240
    %v242 = vxor.u32 %v232, 2147483648
    %v243 = vxor.u32 %v235, 2147483648
    %v244 = vxor.u32 %v238, 2147483648
    %v245 = vxor.u32 %v241, 2147483648
    %v246 = vmul.f32 %v242, 1.442695
    %v247 = vpow.pop %v246
    %v248 = vmul.f32 %v243, 1.442695
    %v249 = vpow.pop %v248
    %v250 = vmul.f32 %v244, 1.442695
    %v251 = vpow.pop %v250
    %v252 = vmul.f32 %v245, 1.442695
    %v253 = vpow.pop %v252
    %v254 = vadd.f32 %v247, 1.0
    %v255 = vadd.f32 %v249, 1.0
    %v256 = vadd.f32 %v251, 1.0
    %v257 = vadd.f32 %v253, 1.0
    %v258 = vrcp.pop %v254
    %v259 = vmul.f32 1.0, %v258
    %v260 = vrcp.pop %v255
    %v261 = vmul.f32 1.0, %v260
    %v262 = vrcp.pop %v256
    %v263 = vmul.f32 1.0, %v262
    %v264 = vrcp.pop %v257
    %v265 = vmul.f32 1.0, %v264
    %v266 = vadd.f32 %v183, %v185
    %v267 = vadd.f32 %v266, %v187
    %v268 = vadd.f32 %v267, %v189
    %v269 = vrot.slane %v268, 4
    %v270 = vadd.f32 %v268, %v269
    %v271 = vrot.slane %v270, 2
    %v272 = vadd.f32 %v270, %v271
    %v273 = vrot.slane %v272, 1
    %v274 = vadd.f32 %v272, %v273
    %v275 = vadd.f32 %v184, %v186
    %v276 = vadd.f32 %v275, %v188
    %v277 = vadd.f32 %v276, %v190
    %v278 = vrot.slane %v277, 4
    %v279 = vadd.f32 %v277, %v278
    %v280 = vrot.slane %v279, 2
    %v281 = vadd.f32 %v279, %v280
    %v282 = vrot.slane %v281, 1
    %v283 = vadd.f32 %v281, %v282
    %v284 = vrcp.pop 32.0
    %v285 = vmul.f32 %v274, %v284
    %v286 = vmul.f32 %v283, %v284
    %v287 = vmax.f32 %v183, %v187
    %v288 = vmax.f32 %v185, %v189
    %v289 = vmax.f32 %v287, %v288
    %v290 = vrot.slane %v289, 4
    %v291 = vmax.f32 %v289, %v290
    %v292 = vrot.slane %v291, 2
    %v293 = vmax.f32 %v291, %v292
    %v294 = vrot.slane %v293, 1
    %v295 = vmax.f32 %v293, %v294
    %v296 = vmax.f32 %v184, %v188
    %v297 = vmax.f32 %v186, %v190
    %v298 = vmax.f32 %v296, %v297
    %v299 = vrot.slane %v298, 4
    %v300 = vmax.f32 %v298, %v299
    %v301 = vrot.slane %v300, 2
    %v302 = vmax.f32 %v300, %v301
    %v303 = vrot.slane %v302, 1
    %v304 = vmax.f32 %v302, %v303
    %305 = vrot.lane.b32.xlu0 %v285, 32
    %v306 = vpop.permute.xlu0 %305
    %307 = vrot.lane.b32.xlu0 %v286, 32
    %v308 = vpop.permute.xlu0 %307
    %vm309 = vcmp.lt.s32.totalorder %v101, 32
    %v310 = vsel %vm309, %v306, %v308
    %v311 = vsel %vm309, %v308, %v306
    %v312 = vsel %vm131, %v311, 0.0
    %v313 = vsel %vm132, %v310, 0.0
    %314 = vrot.lane.b32.xlu0 %v295, 32
    %v315 = vpop.permute.xlu0 %314
    %316 = vrot.lane.b32.xlu0 %v304, 32
    %v317 = vpop.permute.xlu0 %316
    %v318 = vsel %vm309, %v315, %v317
    %v319 = vsel %vm309, %v317, %v315
    %v320 = vsel %vm131, %v319, 0.0
    %v321 = vsel %vm132, %v318, 0.0
    %322 = vrot.lane.b32.xlu0 %v285, 16
    %v323 = vpop.permute.xlu0 %322
    %324 = vrot.lane.b32.xlu0 %v286, 16
    %v325 = vpop.permute.xlu0 %324
    %vm326 = vcmp.lt.s32.totalorder %v101, 16
    %v327 = vsel %vm326, %v323, %v325
    %v328 = vsel %vm326, %v325, %v323
    %v329 = vsel %vm137, %v328, 0.0
    %v330 = vsel %vm138, %v327, 0.0
    %331 = vrot.lane.b32.xlu0 %v295, 16
    %v332 = vpop.permute.xlu0 %331
    %333 = vrot.lane.b32.xlu0 %v304, 16
    %v334 = vpop.permute.xlu0 %333
    %v335 = vsel %vm326, %v332, %v334
    %v336 = vsel %vm326, %v334, %v332
    %v337 = vsel %vm137, %v336, 0.0
    %v338 = vsel %vm138, %v335, 0.0
    %339 = vrot.lane.b32.xlu0 %v285, 112
    %v340 = vpop.permute.xlu0 %339
    %341 = vrot.lane.b32.xlu0 %v286, 112
    %v342 = vpop.permute.xlu0 %341
    %vm343 = vcmp.lt.s32.totalorder %v101, 112
    %v344 = vsel %vm343, %v340, %v342
    %v345 = vsel %vm343, %v342, %v340
    %v346 = vsel %vm143, %v344, 0.0
    %v347 = vsel %vm144, %v345, 0.0
    %348 = vrot.lane.b32.xlu0 %v295, 112
    %v349 = vpop.permute.xlu0 %348
    %350 = vrot.lane.b32.xlu0 %v304, 112
    %v351 = vpop.permute.xlu0 %350
    %v352 = vsel %vm343, %v349, %v351
    %v353 = vsel %vm343, %v351, %v349
    %v354 = vsel %vm143, %v352, 0.0
    %v355 = vsel %vm144, %v353, 0.0
    %356 = vrot.lane.b32.xlu0 %v285, 96
    %v357 = vpop.permute.xlu0 %356
    %358 = vrot.lane.b32.xlu0 %v286, 96
    %v359 = vpop.permute.xlu0 %358
    %vm360 = vcmp.lt.s32.totalorder %v101, 96
    %v361 = vsel %vm360, %v357, %v359
    %v362 = vsel %vm360, %v359, %v357
    %v363 = vsel %vm149, %v361, 0.0
    %v364 = vsel %vm150, %v362, 0.0
    %365 = vrot.lane.b32.xlu0 %v295, 96
    %v366 = vpop.permute.xlu0 %365
    %367 = vrot.lane.b32.xlu0 %v304, 96
    %v368 = vpop.permute.xlu0 %367
    %v369 = vsel %vm360, %v366, %v368
    %v370 = vsel %vm360, %v368, %v366
    %v371 = vsel %vm149, %v369, 0.0
    %v372 = vsel %vm150, %v370, 0.0
    %v373 = vstv %s50
    %v374 = vmul.f32 %v373, %v312
    %v375 = vmul.f32 %v373, %v313
    %v376 = vadd.f32 %v374, 0.0
    %v377 = vadd.f32 %v375, 0.0
    %v378 = vstv %s75
    %v379 = vmul.f32 %v378, %v320
    %v380 = vmul.f32 %v378, %v321
    %v381 = vadd.f32 %v376, %v379
    %v382 = vadd.f32 %v377, %v380
    %v383 = vstv %s55
    %v384 = vmul.f32 %v383, %v329
    %v385 = vmul.f32 %v383, %v330
    %v386 = vadd.f32 %v381, %v384
    %v387 = vadd.f32 %v382, %v385
    %v388 = vstv %s80
    %v389 = vmul.f32 %v388, %v337
    %v390 = vmul.f32 %v388, %v338
    %v391 = vadd.f32 %v386, %v389
    %v392 = vadd.f32 %v387, %v390
    %v393 = vstv %s60
    %v394 = vmul.f32 %v393, %v285
    %v395 = vmul.f32 %v393, %v286
    %v396 = vadd.f32 %v391, %v394
    %v397 = vadd.f32 %v392, %v395
    %v398 = vstv %s85
    %v399 = vmul.f32 %v398, %v295
    %v400 = vmul.f32 %v398, %v304
    %v401 = vadd.f32 %v396, %v399
    %v402 = vadd.f32 %v397, %v400
    %v403 = vstv %s65
    %v404 = vmul.f32 %v403, %v346
    %v405 = vmul.f32 %v403, %v347
    %v406 = vadd.f32 %v401, %v404
    %v407 = vadd.f32 %v402, %v405
    %v408 = vstv %s90
    %v409 = vmul.f32 %v408, %v354
    %v410 = vmul.f32 %v408, %v355
    %v411 = vadd.f32 %v406, %v409
    %v412 = vadd.f32 %v407, %v410
    %v413 = vstv %s70
    %v414 = vmul.f32 %v413, %v363
    %v415 = vmul.f32 %v413, %v364
    %v416 = vadd.f32 %v411, %v414
    %v417 = vadd.f32 %v412, %v415
    %v418 = vstv %s95
    %v419 = vmul.f32 %v418, %v371
    %v420 = vmul.f32 %v418, %v372
    %v421 = vadd.f32 %v416, %v419
    %v422 = vadd.f32 %v417, %v420
    %423 = vrot.lane.b32.xlu0 %v421, 2
    %v424 = vpop.permute.xlu0 %423
    %425 = vrot.lane.b32.xlu0 %v422, 2
    %v426 = vpop.permute.xlu0 %425
    %vm427 = vcmp.lt.s32.totalorder %v101, 2
    %v428 = vsel %vm427, %v424, %v426
    %v429 = vsel %vm427, %v426, %v424
    %v430 = vsel %vm157, %v429, 0.0
    %v431 = vsel %vm158, %v428, 0.0
    %v432 = vadd.f32 %v430, 0.0
    %v433 = vadd.f32 %v431, 0.0
    %v434 = vstv %s51
    %v435 = vmul.f32 %v434, %v312
    %v436 = vmul.f32 %v434, %v313
    %v437 = vadd.f32 %v435, 0.0
    %v438 = vadd.f32 %v436, 0.0
    %v439 = vstv %s76
    %v440 = vmul.f32 %v439, %v320
    %v441 = vmul.f32 %v439, %v321
    %v442 = vadd.f32 %v437, %v440
    %v443 = vadd.f32 %v438, %v441
    %v444 = vstv %s56
    %v445 = vmul.f32 %v444, %v329
    %v446 = vmul.f32 %v444, %v330
    %v447 = vadd.f32 %v442, %v445
    %v448 = vadd.f32 %v443, %v446
    %v449 = vstv %s81
    %v450 = vmul.f32 %v449, %v337
    %v451 = vmul.f32 %v449, %v338
    %v452 = vadd.f32 %v447, %v450
    %v453 = vadd.f32 %v448, %v451
    %v454 = vstv %s61
    %v455 = vmul.f32 %v454, %v285
    %v456 = vmul.f32 %v454, %v286
    %v457 = vadd.f32 %v452, %v455
    %v458 = vadd.f32 %v453, %v456
    %v459 = vstv %s86
    %v460 = vmul.f32 %v459, %v295
    %v461 = vmul.f32 %v459, %v304
    %v462 = vadd.f32 %v457, %v460
    %v463 = vadd.f32 %v458, %v461
    %v464 = vstv %s66
    %v465 = vmul.f32 %v464, %v346
    %v466 = vmul.f32 %v464, %v347
    %v467 = vadd.f32 %v462, %v465
    %v468 = vadd.f32 %v463, %v466
    %v469 = vstv %s91
    %v470 = vmul.f32 %v469, %v354
    %v471 = vmul.f32 %v469, %v355
    %v472 = vadd.f32 %v467, %v470
    %v473 = vadd.f32 %v468, %v471
    %v474 = vstv %s71
    %v475 = vmul.f32 %v474, %v363
    %v476 = vmul.f32 %v474, %v364
    %v477 = vadd.f32 %v472, %v475
    %v478 = vadd.f32 %v473, %v476
    %v479 = vstv %s96
    %v480 = vmul.f32 %v479, %v371
    %v481 = vmul.f32 %v479, %v372
    %v482 = vadd.f32 %v477, %v480
    %v483 = vadd.f32 %v478, %v481
    %484 = vrot.lane.b32.xlu0 %v482, 1
    %v485 = vpop.permute.xlu0 %484
    %486 = vrot.lane.b32.xlu0 %v483, 1
    %v487 = vpop.permute.xlu0 %486
    %vm488 = vcmp.lt.s32.totalorder %v101, 1
    %v489 = vsel %vm488, %v485, %v487
    %v490 = vsel %vm488, %v487, %v485
    %v491 = vsel %vm165, %v490, 0.0
    %v492 = vsel %vm166, %v489, 0.0
    %v493 = vadd.f32 %v432, %v491
    %v494 = vadd.f32 %v433, %v492
    %v495 = vstv %s52
    %v496 = vmul.f32 %v495, %v312
    %v497 = vmul.f32 %v495, %v313
    %v498 = vadd.f32 %v496, 0.0
    %v499 = vadd.f32 %v497, 0.0
    %v500 = vstv %s77
    %v501 = vmul.f32 %v500, %v320
    %v502 = vmul.f32 %v500, %v321
    %v503 = vadd.f32 %v498, %v501
    %v504 = vadd.f32 %v499, %v502
    %v505 = vstv %s57
    %v506 = vmul.f32 %v505, %v329
    %v507 = vmul.f32 %v505, %v330
    %v508 = vadd.f32 %v503, %v506
    %v509 = vadd.f32 %v504, %v507
    %v510 = vstv %s82
    %v511 = vmul.f32 %v510, %v337
    %v512 = vmul.f32 %v510, %v338
    %v513 = vadd.f32 %v508, %v511
    %v514 = vadd.f32 %v509, %v512
    %v515 = vstv %s62
    %v516 = vmul.f32 %v515, %v285
    %v517 = vmul.f32 %v515, %v286
    %v518 = vadd.f32 %v513, %v516
    %v519 = vadd.f32 %v514, %v517
    %v520 = vstv %s87
    %v521 = vmul.f32 %v520, %v295
    %v522 = vmul.f32 %v520, %v304
    %v523 = vadd.f32 %v518, %v521
    %v524 = vadd.f32 %v519, %v522
    %v525 = vstv %s67
    %v526 = vmul.f32 %v525, %v346
    %v527 = vmul.f32 %v525, %v347
    %v528 = vadd.f32 %v523, %v526
    %v529 = vadd.f32 %v524, %v527
    %v530 = vstv %s92
    %v531 = vmul.f32 %v530, %v354
    %v532 = vmul.f32 %v530, %v355
    %v533 = vadd.f32 %v528, %v531
    %v534 = vadd.f32 %v529, %v532
    %v535 = vstv %s72
    %v536 = vmul.f32 %v535, %v363
    %v537 = vmul.f32 %v535, %v364
    %v538 = vadd.f32 %v533, %v536
    %v539 = vadd.f32 %v534, %v537
    %v540 = vstv %s97
    %v541 = vmul.f32 %v540, %v371
    %v542 = vmul.f32 %v540, %v372
    %v543 = vadd.f32 %v538, %v541
    %v544 = vadd.f32 %v539, %v542
    %v545 = vadd.f32 %v493, %v543
    %v546 = vadd.f32 %v494, %v544
    %v547 = vstv %s53
    %v548 = vmul.f32 %v547, %v312
    %v549 = vmul.f32 %v547, %v313
    %v550 = vadd.f32 %v548, 0.0
    %v551 = vadd.f32 %v549, 0.0
    %v552 = vstv %s78
    %v553 = vmul.f32 %v552, %v320
    %v554 = vmul.f32 %v552, %v321
    %v555 = vadd.f32 %v550, %v553
    %v556 = vadd.f32 %v551, %v554
    %v557 = vstv %s58
    %v558 = vmul.f32 %v557, %v329
    %v559 = vmul.f32 %v557, %v330
    %v560 = vadd.f32 %v555, %v558
    %v561 = vadd.f32 %v556, %v559
    %v562 = vstv %s83
    %v563 = vmul.f32 %v562, %v337
    %v564 = vmul.f32 %v562, %v338
    %v565 = vadd.f32 %v560, %v563
    %v566 = vadd.f32 %v561, %v564
    %v567 = vstv %s63
    %v568 = vmul.f32 %v567, %v285
    %v569 = vmul.f32 %v567, %v286
    %v570 = vadd.f32 %v565, %v568
    %v571 = vadd.f32 %v566, %v569
    %v572 = vstv %s88
    %v573 = vmul.f32 %v572, %v295
    %v574 = vmul.f32 %v572, %v304
    %v575 = vadd.f32 %v570, %v573
    %v576 = vadd.f32 %v571, %v574
    %v577 = vstv %s68
    %v578 = vmul.f32 %v577, %v346
    %v579 = vmul.f32 %v577, %v347
    %v580 = vadd.f32 %v575, %v578
    %v581 = vadd.f32 %v576, %v579
    %v582 = vstv %s93
    %v583 = vmul.f32 %v582, %v354
    %v584 = vmul.f32 %v582, %v355
    %v585 = vadd.f32 %v580, %v583
    %v586 = vadd.f32 %v581, %v584
    %v587 = vstv %s73
    %v588 = vmul.f32 %v587, %v363
    %v589 = vmul.f32 %v587, %v364
    %v590 = vadd.f32 %v585, %v588
    %v591 = vadd.f32 %v586, %v589
    %v592 = vstv %s98
    %v593 = vmul.f32 %v592, %v371
    %v594 = vmul.f32 %v592, %v372
    %v595 = vadd.f32 %v590, %v593
    %v596 = vadd.f32 %v591, %v594
    %597 = vrot.lane.b32.xlu0 %v595, 127
    %v598 = vpop.permute.xlu0 %597
    %599 = vrot.lane.b32.xlu0 %v596, 127
    %v600 = vpop.permute.xlu0 %599
    %vm601 = vcmp.lt.s32.totalorder %v101, 127
    %v602 = vsel %vm601, %v598, %v600
    %v603 = vsel %vm601, %v600, %v598
    %v604 = vsel %vm173, %v602, 0.0
    %v605 = vsel %vm174, %v603, 0.0
    %v606 = vadd.f32 %v545, %v604
    %v607 = vadd.f32 %v546, %v605
    %v608 = vstv %s54
    %v609 = vmul.f32 %v608, %v312
    %v610 = vmul.f32 %v608, %v313
    %v611 = vadd.f32 %v609, 0.0
    %v612 = vadd.f32 %v610, 0.0
    %v613 = vstv %s79
    %v614 = vmul.f32 %v613, %v320
    %v615 = vmul.f32 %v613, %v321
    %v616 = vadd.f32 %v611, %v614
    %v617 = vadd.f32 %v612, %v615
    %v618 = vstv %s59
    %v619 = vmul.f32 %v618, %v329
    %v620 = vmul.f32 %v618, %v330
    %v621 = vadd.f32 %v616, %v619
    %v622 = vadd.f32 %v617, %v620
    %v623 = vstv %s84
    %v624 = vmul.f32 %v623, %v337
    %v625 = vmul.f32 %v623, %v338
    %v626 = vadd.f32 %v621, %v624
    %v627 = vadd.f32 %v622, %v625
    %v628 = vstv %s64
    %v629 = vmul.f32 %v628, %v285
    %v630 = vmul.f32 %v628, %v286
    %v631 = vadd.f32 %v626, %v629
    %v632 = vadd.f32 %v627, %v630
    %v633 = vstv %s89
    %v634 = vmul.f32 %v633, %v295
    %v635 = vmul.f32 %v633, %v304
    %v636 = vadd.f32 %v631, %v634
    %v637 = vadd.f32 %v632, %v635
    %v638 = vstv %s69
    %v639 = vmul.f32 %v638, %v346
    %v640 = vmul.f32 %v638, %v347
    %v641 = vadd.f32 %v636, %v639
    %v642 = vadd.f32 %v637, %v640
    %v643 = vstv %s94
    %v644 = vmul.f32 %v643, %v354
    %v645 = vmul.f32 %v643, %v355
    %v646 = vadd.f32 %v641, %v644
    %v647 = vadd.f32 %v642, %v645
    %v648 = vstv %s74
    %v649 = vmul.f32 %v648, %v363
    %v650 = vmul.f32 %v648, %v364
    %v651 = vadd.f32 %v646, %v649
    %v652 = vadd.f32 %v647, %v650
    %v653 = vstv %s99
    %v654 = vmul.f32 %v653, %v371
    %v655 = vmul.f32 %v653, %v372
    %v656 = vadd.f32 %v651, %v654
    %v657 = vadd.f32 %v652, %v655
    %658 = vrot.lane.b32.xlu0 %v656, 126
    %v659 = vpop.permute.xlu0 %658
    %660 = vrot.lane.b32.xlu0 %v657, 126
    %v661 = vpop.permute.xlu0 %660
    %vm662 = vcmp.lt.s32.totalorder %v101, 126
    %v663 = vsel %vm662, %v659, %v661
    %v664 = vsel %vm662, %v661, %v659
    %v665 = vsel %vm181, %v663, 0.0
    %v666 = vsel %vm182, %v664, 0.0
    %v667 = vadd.f32 %v606, %v665
    %v668 = vadd.f32 %v607, %v666
    %v669 = vxor.u32 %v667, 2147483648
    %v670 = vxor.u32 %v668, 2147483648
    %v671 = vmul.f32 %v669, 1.442695
    %v672 = vpow.pop %v671
    %v673 = vmul.f32 %v670, 1.442695
    %v674 = vpow.pop %v673
    %v675 = vadd.f32 %v672, 1.0
    %v676 = vadd.f32 %v674, 1.0
    %v677 = vrcp.pop %v675
    %v678 = vmul.f32 1.0, %v677
    %v679 = vrcp.pop %v676
    %v680 = vmul.f32 1.0, %v679
    %v681 = vmul.f32 %v183, %v259
    %v682 = vmul.f32 %v184, %v259
    %v683 = vmul.f32 %v185, %v261
    %v684 = vmul.f32 %v186, %v261
    %v685 = vmul.f32 %v187, %v263
    %v686 = vmul.f32 %v188, %v263
    %v687 = vmul.f32 %v189, %v265
    %v688 = vmul.f32 %v190, %v265
    %v689 = vlaneseq
    %v690 = vshrl.u32 %v689, 7
    %v691 = vsub.s32 0, %v690
    %v692 = vrot.slane %v678, %v691
    %v693 = vlaneseq
    %v694 = vshrl.u32 %v693, 7
    %v695 = vsub.s32 0, %v694
    %v696 = vrot.slane %v680, %v695
    %v697 = vmul.f32 %v681, %v692
    %v698 = vmul.f32 %v682, %v696
    %v699 = vmul.f32 %v683, %v692
    %v700 = vmul.f32 %v684, %v696
    %v701 = vmul.f32 %v685, %v692
    %v702 = vmul.f32 %v686, %v696
    %v703 = vmul.f32 %v687, %v692
    %v704 = vmul.f32 %v688, %v696
    %v705 = vadd.f32 %v183, %v697
    %v706 = vadd.f32 %v184, %v698
    %v707 = vadd.f32 %v185, %v699
    %v708 = vadd.f32 %v186, %v700
    %v709 = vadd.f32 %v187, %v701
    %v710 = vadd.f32 %v188, %v702
    %v711 = vadd.f32 %v189, %v703
    %v712 = vadd.f32 %v190, %v704
    %713 = vst [vmem:[#allocation7] sm:$0xff] %v705
    %714 = vst [vmem:[#allocation7 + $0x8] sm:$0xff] %v706
    %715 = vst [vmem:[#allocation7 + $0x10] sm:$0xff] %v707
    %716 = vst [vmem:[#allocation7 + $0x18] sm:$0xff] %v708
    %717 = vst [vmem:[#allocation7 + $0x20] sm:$0xff] %v709
    %718 = vst [vmem:[#allocation7 + $0x28] sm:$0xff] %v710
    %719 = vst [vmem:[#allocation7 + $0x30] sm:$0xff] %v711
    %720 = vst [vmem:[#allocation7 + $0x38] sm:$0xff] %v712
    %s721 = scalar_lea.vmem [#allocation2], 64
    %v722 = vld [vmem:[%s721] sm:$0xff]
    %v723 = vld [vmem:[%s721 + $0x8] sm:$0xff]
    %v724 = vld [vmem:[%s721 + $0x10] sm:$0xff]
    %v725 = vld [vmem:[%s721 + $0x18] sm:$0xff]
    %v726 = vld [vmem:[%s721 + $0x20] sm:$0xff]
    %v727 = vld [vmem:[%s721 + $0x28] sm:$0xff]
    %v728 = vld [vmem:[%s721 + $0x30] sm:$0xff]
    %v729 = vld [vmem:[%s721 + $0x38] sm:$0xff]
    %v730 = vadd.f32 %v722, %v723
    %731 = vadd.xlane.f32.xlu0 %v730
    %v732 = vpop.xlane.xlu0 %731
    %v733 = vadd.f32 %v724, %v725
    %734 = vadd.xlane.f32.xlu0 %v733
    %v735 = vpop.xlane.xlu0 %734
    %v736 = vadd.f32 %v726, %v727
    %737 = vadd.xlane.f32.xlu0 %v736
    %v738 = vpop.xlane.xlu0 %737
    %v739 = vadd.f32 %v728, %v729
    %740 = vadd.xlane.f32.xlu0 %v739
    %v741 = vpop.xlane.xlu0 %740
    %v742 = vmul.f32 %v732, 0.00390625
    %v743 = vmul.f32 %v735, 0.00390625
    %v744 = vmul.f32 %v738, 0.00390625
    %v745 = vmul.f32 %v741, 0.00390625
    %v746 = vmul.f32 %v42, %v742
    %v747 = vmul.f32 %v43, %v743
    %v748 = vmul.f32 %v44, %v744
    %v749 = vmul.f32 %v45, %v745
    %v750 = vsel %vm211, %v746, 0.0
    %v751 = vsel %vm211, %v747, 0.0
    %v752 = vadd.f32 %v750, %v751
    %v753 = vsel %vm211, %v748, 0.0
    %v754 = vadd.f32 %v752, %v753
    %v755 = vsel %vm211, %v749, 0.0
    %v756 = vadd.f32 %v754, %v755
    %v757 = vrot.slane %v756, 4
    %v758 = vadd.f32 %v756, %v757
    %v759 = vrot.slane %v758, 2
    %v760 = vadd.f32 %v758, %v759
    %v761 = vrot.slane %v760, 1
    %v762 = vadd.f32 %v760, %v761
    %v763 = vmax.f32 %v762, 0.0
    %v764 = vmul.f32 %v46, %v763
    %v765 = vmul.f32 %v47, %v763
    %v766 = vmul.f32 %v48, %v763
    %v767 = vmul.f32 %v49, %v763
    %v768 = vsel %vm211, %v764, 0.0
    %769 = vadd.xlane.f32.xlu0 %v768
    %v770 = vpop.xlane.xlu0 %769
    %v771 = vsel %vm211, %v765, 0.0
    %772 = vadd.xlane.f32.xlu0 %v771
    %v773 = vpop.xlane.xlu0 %772
    %v774 = vsel %vm211, %v766, 0.0
    %775 = vadd.xlane.f32.xlu0 %v774
    %v776 = vpop.xlane.xlu0 %775
    %v777 = vsel %vm211, %v767, 0.0
    %778 = vadd.xlane.f32.xlu0 %v777
    %v779 = vpop.xlane.xlu0 %778
    %v780 = vxor.u32 %v770, 2147483648
    %v781 = vxor.u32 %v773, 2147483648
    %v782 = vxor.u32 %v776, 2147483648
    %v783 = vxor.u32 %v779, 2147483648
    %v784 = vmul.f32 %v780, 1.442695
    %v785 = vpow.pop %v784
    %v786 = vmul.f32 %v781, 1.442695
    %v787 = vpow.pop %v786
    %v788 = vmul.f32 %v782, 1.442695
    %v789 = vpow.pop %v788
    %v790 = vmul.f32 %v783, 1.442695
    %v791 = vpow.pop %v790
    %v792 = vadd.f32 %v785, 1.0
    %v793 = vadd.f32 %v787, 1.0
    %v794 = vadd.f32 %v789, 1.0
    %v795 = vadd.f32 %v791, 1.0
    %v796 = vrcp.pop %v792
    %v797 = vmul.f32 1.0, %v796
    %v798 = vrcp.pop %v793
    %v799 = vmul.f32 1.0, %v798
    %v800 = vrcp.pop %v794
    %v801 = vmul.f32 1.0, %v800
    %v802 = vrcp.pop %v795
    %v803 = vmul.f32 1.0, %v802
    %v804 = vadd.f32 %v722, %v724
    %v805 = vadd.f32 %v804, %v726
    %v806 = vadd.f32 %v805, %v728
    %v807 = vrot.slane %v806, 4
    %v808 = vadd.f32 %v806, %v807
    %v809 = vrot.slane %v808, 2
    %v810 = vadd.f32 %v808, %v809
    %v811 = vrot.slane %v810, 1
    %v812 = vadd.f32 %v810, %v811
    %v813 = vadd.f32 %v723, %v725
    %v814 = vadd.f32 %v813, %v727
    %v815 = vadd.f32 %v814, %v729
    %v816 = vrot.slane %v815, 4
    %v817 = vadd.f32 %v815, %v816
    %v818 = vrot.slane %v817, 2
    %v819 = vadd.f32 %v817, %v818
    %v820 = vrot.slane %v819, 1
    %v821 = vadd.f32 %v819, %v820
    %v822 = vmul.f32 %v812, %v284
    %v823 = vmul.f32 %v821, %v284
    %v824 = vmax.f32 %v722, %v726
    %v825 = vmax.f32 %v724, %v728
    %v826 = vmax.f32 %v824, %v825
    %v827 = vrot.slane %v826, 4
    %v828 = vmax.f32 %v826, %v827
    %v829 = vrot.slane %v828, 2
    %v830 = vmax.f32 %v828, %v829
    %v831 = vrot.slane %v830, 1
    %v832 = vmax.f32 %v830, %v831
    %v833 = vmax.f32 %v723, %v727
    %v834 = vmax.f32 %v725, %v729
    %v835 = vmax.f32 %v833, %v834
    %v836 = vrot.slane %v835, 4
    %v837 = vmax.f32 %v835, %v836
    %v838 = vrot.slane %v837, 2
    %v839 = vmax.f32 %v837, %v838
    %v840 = vrot.slane %v839, 1
    %v841 = vmax.f32 %v839, %v840
    %842 = vrot.lane.b32.xlu0 %v822, 32
    %v843 = vpop.permute.xlu0 %842
    %844 = vrot.lane.b32.xlu0 %v823, 32
    %v845 = vpop.permute.xlu0 %844
    %v846 = vsel %vm309, %v843, %v845
    %v847 = vsel %vm309, %v845, %v843
    %v848 = vsel %vm131, %v847, 0.0
    %v849 = vsel %vm132, %v846, 0.0
    %850 = vrot.lane.b32.xlu0 %v832, 32
    %v851 = vpop.permute.xlu0 %850
    %852 = vrot.lane.b32.xlu0 %v841, 32
    %v853 = vpop.permute.xlu0 %852
    %v854 = vsel %vm309, %v851, %v853
    %v855 = vsel %vm309, %v853, %v851
    %v856 = vsel %vm131, %v855, 0.0
    %v857 = vsel %vm132, %v854, 0.0
    %858 = vrot.lane.b32.xlu0 %v822, 16
    %v859 = vpop.permute.xlu0 %858
    %860 = vrot.lane.b32.xlu0 %v823, 16
    %v861 = vpop.permute.xlu0 %860
    %v862 = vsel %vm326, %v859, %v861
    %v863 = vsel %vm326, %v861, %v859
    %v864 = vsel %vm137, %v863, 0.0
    %v865 = vsel %vm138, %v862, 0.0
    %866 = vrot.lane.b32.xlu0 %v832, 16
    %v867 = vpop.permute.xlu0 %866
    %868 = vrot.lane.b32.xlu0 %v841, 16
    %v869 = vpop.permute.xlu0 %868
    %v870 = vsel %vm326, %v867, %v869
    %v871 = vsel %vm326, %v869, %v867
    %v872 = vsel %vm137, %v871, 0.0
    %v873 = vsel %vm138, %v870, 0.0
    %874 = vrot.lane.b32.xlu0 %v822, 112
    %v875 = vpop.permute.xlu0 %874
    %876 = vrot.lane.b32.xlu0 %v823, 112
    %v877 = vpop.permute.xlu0 %876
    %v878 = vsel %vm343, %v875, %v877
    %v879 = vsel %vm343, %v877, %v875
    %v880 = vsel %vm143, %v878, 0.0
    %v881 = vsel %vm144, %v879, 0.0
    %882 = vrot.lane.b32.xlu0 %v832, 112
    %v883 = vpop.permute.xlu0 %882
    %884 = vrot.lane.b32.xlu0 %v841, 112
    %v885 = vpop.permute.xlu0 %884
    %v886 = vsel %vm343, %v883, %v885
    %v887 = vsel %vm343, %v885, %v883
    %v888 = vsel %vm143, %v886, 0.0
    %v889 = vsel %vm144, %v887, 0.0
    %890 = vrot.lane.b32.xlu0 %v822, 96
    %v891 = vpop.permute.xlu0 %890
    %892 = vrot.lane.b32.xlu0 %v823, 96
    %v893 = vpop.permute.xlu0 %892
    %v894 = vsel %vm360, %v891, %v893
    %v895 = vsel %vm360, %v893, %v891
    %v896 = vsel %vm149, %v894, 0.0
    %v897 = vsel %vm150, %v895, 0.0
    %898 = vrot.lane.b32.xlu0 %v832, 96
    %v899 = vpop.permute.xlu0 %898
    %900 = vrot.lane.b32.xlu0 %v841, 96
    %v901 = vpop.permute.xlu0 %900
    %v902 = vsel %vm360, %v899, %v901
    %v903 = vsel %vm360, %v901, %v899
    %v904 = vsel %vm149, %v902, 0.0
    %v905 = vsel %vm150, %v903, 0.0
    %v906 = vmul.f32 %v373, %v848
    %v907 = vmul.f32 %v373, %v849
    %v908 = vadd.f32 %v906, 0.0
    %v909 = vadd.f32 %v907, 0.0
    %v910 = vmul.f32 %v378, %v856
    %v911 = vmul.f32 %v378, %v857
    %v912 = vadd.f32 %v908, %v910
    %v913 = vadd.f32 %v909, %v911
    %v914 = vmul.f32 %v383, %v864
    %v915 = vmul.f32 %v383, %v865
    %v916 = vadd.f32 %v912, %v914
    %v917 = vadd.f32 %v913, %v915
    %v918 = vmul.f32 %v388, %v872
    %v919 = vmul.f32 %v388, %v873
    %v920 = vadd.f32 %v916, %v918
    %v921 = vadd.f32 %v917, %v919
    %v922 = vmul.f32 %v393, %v822
    %v923 = vmul.f32 %v393, %v823
    %v924 = vadd.f32 %v920, %v922
    %v925 = vadd.f32 %v921, %v923
    %v926 = vmul.f32 %v398, %v832
    %v927 = vmul.f32 %v398, %v841
    %v928 = vadd.f32 %v924, %v926
    %v929 = vadd.f32 %v925, %v927
    %v930 = vmul.f32 %v403, %v880
    %v931 = vmul.f32 %v403, %v881
    %v932 = vadd.f32 %v928, %v930
    %v933 = vadd.f32 %v929, %v931
    %v934 = vmul.f32 %v408, %v888
    %v935 = vmul.f32 %v408, %v889
    %v936 = vadd.f32 %v932, %v934
    %v937 = vadd.f32 %v933, %v935
    %v938 = vmul.f32 %v413, %v896
    %v939 = vmul.f32 %v413, %v897
    %v940 = vadd.f32 %v936, %v938
    %v941 = vadd.f32 %v937, %v939
    %v942 = vmul.f32 %v418, %v904
    %v943 = vmul.f32 %v418, %v905
    %v944 = vadd.f32 %v940, %v942
    %v945 = vadd.f32 %v941, %v943
    %946 = vrot.lane.b32.xlu0 %v944, 2
    %v947 = vpop.permute.xlu0 %946
    %948 = vrot.lane.b32.xlu0 %v945, 2
    %v949 = vpop.permute.xlu0 %948
    %v950 = vsel %vm427, %v947, %v949
    %v951 = vsel %vm427, %v949, %v947
    %v952 = vsel %vm157, %v951, 0.0
    %v953 = vsel %vm158, %v950, 0.0
    %v954 = vadd.f32 %v952, 0.0
    %v955 = vadd.f32 %v953, 0.0
    %v956 = vmul.f32 %v434, %v848
    %v957 = vmul.f32 %v434, %v849
    %v958 = vadd.f32 %v956, 0.0
    %v959 = vadd.f32 %v957, 0.0
    %v960 = vmul.f32 %v439, %v856
    %v961 = vmul.f32 %v439, %v857
    %v962 = vadd.f32 %v958, %v960
    %v963 = vadd.f32 %v959, %v961
    %v964 = vmul.f32 %v444, %v864
    %v965 = vmul.f32 %v444, %v865
    %v966 = vadd.f32 %v962, %v964
    %v967 = vadd.f32 %v963, %v965
    %v968 = vmul.f32 %v449, %v872
    %v969 = vmul.f32 %v449, %v873
    %v970 = vadd.f32 %v966, %v968
    %v971 = vadd.f32 %v967, %v969
    %v972 = vmul.f32 %v454, %v822
    %v973 = vmul.f32 %v454, %v823
    %v974 = vadd.f32 %v970, %v972
    %v975 = vadd.f32 %v971, %v973
    %v976 = vmul.f32 %v459, %v832
    %v977 = vmul.f32 %v459, %v841
    %v978 = vadd.f32 %v974, %v976
    %v979 = vadd.f32 %v975, %v977
    %v980 = vmul.f32 %v464, %v880
    %v981 = vmul.f32 %v464, %v881
    %v982 = vadd.f32 %v978, %v980
    %v983 = vadd.f32 %v979, %v981
    %v984 = vmul.f32 %v469, %v888
    %v985 = vmul.f32 %v469, %v889
    %v986 = vadd.f32 %v982, %v984
    %v987 = vadd.f32 %v983, %v985
    %v988 = vmul.f32 %v474, %v896
    %v989 = vmul.f32 %v474, %v897
    %v990 = vadd.f32 %v986, %v988
    %v991 = vadd.f32 %v987, %v989
    %v992 = vmul.f32 %v479, %v904
    %v993 = vmul.f32 %v479, %v905
    %v994 = vadd.f32 %v990, %v992
    %v995 = vadd.f32 %v991, %v993
    %996 = vrot.lane.b32.xlu0 %v994, 1
    %v997 = vpop.permute.xlu0 %996
    %998 = vrot.lane.b32.xlu0 %v995, 1
    %v999 = vpop.permute.xlu0 %998
    %v1000 = vsel %vm488, %v997, %v999
    %v1001 = vsel %vm488, %v999, %v997
    %v1002 = vsel %vm165, %v1001, 0.0
    %v1003 = vsel %vm166, %v1000, 0.0
    %v1004 = vadd.f32 %v954, %v1002
    %v1005 = vadd.f32 %v955, %v1003
    %v1006 = vmul.f32 %v495, %v848
    %v1007 = vmul.f32 %v495, %v849
    %v1008 = vadd.f32 %v1006, 0.0
    %v1009 = vadd.f32 %v1007, 0.0
    %v1010 = vmul.f32 %v500, %v856
    %v1011 = vmul.f32 %v500, %v857
    %v1012 = vadd.f32 %v1008, %v1010
    %v1013 = vadd.f32 %v1009, %v1011
    %v1014 = vmul.f32 %v505, %v864
    %v1015 = vmul.f32 %v505, %v865
    %v1016 = vadd.f32 %v1012, %v1014
    %v1017 = vadd.f32 %v1013, %v1015
    %v1018 = vmul.f32 %v510, %v872
    %v1019 = vmul.f32 %v510, %v873
    %v1020 = vadd.f32 %v1016, %v1018
    %v1021 = vadd.f32 %v1017, %v1019
    %v1022 = vmul.f32 %v515, %v822
    %v1023 = vmul.f32 %v515, %v823
    %v1024 = vadd.f32 %v1020, %v1022
    %v1025 = vadd.f32 %v1021, %v1023
    %v1026 = vmul.f32 %v520, %v832
    %v1027 = vmul.f32 %v520, %v841
    %v1028 = vadd.f32 %v1024, %v1026
    %v1029 = vadd.f32 %v1025, %v1027
    %v1030 = vmul.f32 %v525, %v880
    %v1031 = vmul.f32 %v525, %v881
    %v1032 = vadd.f32 %v1028, %v1030
    %v1033 = vadd.f32 %v1029, %v1031
    %v1034 = vmul.f32 %v530, %v888
    %v1035 = vmul.f32 %v530, %v889
    %v1036 = vadd.f32 %v1032, %v1034
    %v1037 = vadd.f32 %v1033, %v1035
    %v1038 = vmul.f32 %v535, %v896
    %v1039 = vmul.f32 %v535, %v897
    %v1040 = vadd.f32 %v1036, %v1038
    %v1041 = vadd.f32 %v1037, %v1039
    %v1042 = vmul.f32 %v540, %v904
    %v1043 = vmul.f32 %v540, %v905
    %v1044 = vadd.f32 %v1040, %v1042
    %v1045 = vadd.f32 %v1041, %v1043
    %v1046 = vadd.f32 %v1004, %v1044
    %v1047 = vadd.f32 %v1005, %v1045
    %v1048 = vmul.f32 %v547, %v848
    %v1049 = vmul.f32 %v547, %v849
    %v1050 = vadd.f32 %v1048, 0.0
    %v1051 = vadd.f32 %v1049, 0.0
    %v1052 = vmul.f32 %v552, %v856
    %v1053 = vmul.f32 %v552, %v857
    %v1054 = vadd.f32 %v1050, %v1052
    %v1055 = vadd.f32 %v1051, %v1053
    %v1056 = vmul.f32 %v557, %v864
    %v1057 = vmul.f32 %v557, %v865
    %v1058 = vadd.f32 %v1054, %v1056
    %v1059 = vadd.f32 %v1055, %v1057
    %v1060 = vmul.f32 %v562, %v872
    %v1061 = vmul.f32 %v562, %v873
    %v1062 = vadd.f32 %v1058, %v1060
    %v1063 = vadd.f32 %v1059, %v1061
    %v1064 = vmul.f32 %v567, %v822
    %v1065 = vmul.f32 %v567, %v823
    %v1066 = vadd.f32 %v1062, %v1064
    %v1067 = vadd.f32 %v1063, %v1065
    %v1068 = vmul.f32 %v572, %v832
    %v1069 = vmul.f32 %v572, %v841
    %v1070 = vadd.f32 %v1066, %v1068
    %v1071 = vadd.f32 %v1067, %v1069
    %v1072 = vmul.f32 %v577, %v880
    %v1073 = vmul.f32 %v577, %v881
    %v1074 = vadd.f32 %v1070, %v1072
    %v1075 = vadd.f32 %v1071, %v1073
    %v1076 = vmul.f32 %v582, %v888
    %v1077 = vmul.f32 %v582, %v889
    %v1078 = vadd.f32 %v1074, %v1076
    %v1079 = vadd.f32 %v1075, %v1077
    %v1080 = vmul.f32 %v587, %v896
    %v1081 = vmul.f32 %v587, %v897
    %v1082 = vadd.f32 %v1078, %v1080
    %v1083 = vadd.f32 %v1079, %v1081
    %v1084 = vmul.f32 %v592, %v904
    %v1085 = vmul.f32 %v592, %v905
    %v1086 = vadd.f32 %v1082, %v1084
    %v1087 = vadd.f32 %v1083, %v1085
    %1088 = vrot.lane.b32.xlu0 %v1086, 127
    %v1089 = vpop.permute.xlu0 %1088
    %1090 = vrot.lane.b32.xlu0 %v1087, 127
    %v1091 = vpop.permute.xlu0 %1090
    %v1092 = vsel %vm601, %v1089, %v1091
    %v1093 = vsel %vm601, %v1091, %v1089
    %v1094 = vsel %vm173, %v1092, 0.0
    %v1095 = vsel %vm174, %v1093, 0.0
    %v1096 = vadd.f32 %v1046, %v1094
    %v1097 = vadd.f32 %v1047, %v1095
    %v1098 = vmul.f32 %v608, %v848
    %v1099 = vmul.f32 %v608, %v849
    %v1100 = vadd.f32 %v1098, 0.0
    %v1101 = vadd.f32 %v1099, 0.0
    %v1102 = vmul.f32 %v613, %v856
    %v1103 = vmul.f32 %v613, %v857
    %v1104 = vadd.f32 %v1100, %v1102
    %v1105 = vadd.f32 %v1101, %v1103
    %v1106 = vmul.f32 %v618, %v864
    %v1107 = vmul.f32 %v618, %v865
    %v1108 = vadd.f32 %v1104, %v1106
    %v1109 = vadd.f32 %v1105, %v1107
    %v1110 = vmul.f32 %v623, %v872
    %v1111 = vmul.f32 %v623, %v873
    %v1112 = vadd.f32 %v1108, %v1110
    %v1113 = vadd.f32 %v1109, %v1111
    %v1114 = vmul.f32 %v628, %v822
    %v1115 = vmul.f32 %v628, %v823
    %v1116 = vadd.f32 %v1112, %v1114
    %v1117 = vadd.f32 %v1113, %v1115
    %v1118 = vmul.f32 %v633, %v832
    %v1119 = vmul.f32 %v633, %v841
    %v1120 = vadd.f32 %v1116, %v1118
    %v1121 = vadd.f32 %v1117, %v1119
    %v1122 = vmul.f32 %v638, %v880
    %v1123 = vmul.f32 %v638, %v881
    %v1124 = vadd.f32 %v1120, %v1122
    %v1125 = vadd.f32 %v1121, %v1123
    %v1126 = vmul.f32 %v643, %v888
    %v1127 = vmul.f32 %v643, %v889
    %v1128 = vadd.f32 %v1124, %v1126
    %v1129 = vadd.f32 %v1125, %v1127
    %v1130 = vmul.f32 %v648, %v896
    %v1131 = vmul.f32 %v648, %v897
    %v1132 = vadd.f32 %v1128, %v1130
    %v1133 = vadd.f32 %v1129, %v1131
    %v1134 = vmul.f32 %v653, %v904
    %v1135 = vmul.f32 %v653, %v905
    %v1136 = vadd.f32 %v1132, %v1134
    %v1137 = vadd.f32 %v1133, %v1135
    %1138 = vrot.lane.b32.xlu0 %v1136, 126
    %v1139 = vpop.permute.xlu0 %1138
    %1140 = vrot.lane.b32.xlu0 %v1137, 126
    %v1141 = vpop.permute.xlu0 %1140
    %v1142 = vsel %vm662, %v1139, %v1141
    %v1143 = vsel %vm662, %v1141, %v1139
    %v1144 = vsel %vm181, %v1142, 0.0
    %v1145 = vsel %vm182, %v1143, 0.0
    %v1146 = vadd.f32 %v1096, %v1144
    %v1147 = vadd.f32 %v1097, %v1145
    %v1148 = vxor.u32 %v1146, 2147483648
    %v1149 = vxor.u32 %v1147, 2147483648
    %v1150 = vmul.f32 %v1148, 1.442695
    %v1151 = vpow.pop %v1150
    %v1152 = vmul.f32 %v1149, 1.442695
    %v1153 = vpow.pop %v1152
    %v1154 = vadd.f32 %v1151, 1.0
    %v1155 = vadd.f32 %v1153, 1.0
    %v1156 = vrcp.pop %v1154
    %v1157 = vmul.f32 1.0, %v1156
    %v1158 = vrcp.pop %v1155
    %v1159 = vmul.f32 1.0, %v1158
    %v1160 = vmul.f32 %v722, %v797
    %v1161 = vmul.f32 %v723, %v797
    %v1162 = vmul.f32 %v724, %v799
    %v1163 = vmul.f32 %v725, %v799
    %v1164 = vmul.f32 %v726, %v801
    %v1165 = vmul.f32 %v727, %v801
    %v1166 = vmul.f32 %v728, %v803
    %v1167 = vmul.f32 %v729, %v803
    %v1168 = vlaneseq
    %v1169 = vshrl.u32 %v1168, 7
    %v1170 = vsub.s32 0, %v1169
    %v1171 = vrot.slane %v1157, %v1170
    %v1172 = vlaneseq
    %v1173 = vshrl.u32 %v1172, 7
    %v1174 = vsub.s32 0, %v1173
    %v1175 = vrot.slane %v1159, %v1174
    %v1176 = vmul.f32 %v1160, %v1171
    %v1177 = vmul.f32 %v1161, %v1175
    %v1178 = vmul.f32 %v1162, %v1171
    %v1179 = vmul.f32 %v1163, %v1175
    %v1180 = vmul.f32 %v1164, %v1171
    %v1181 = vmul.f32 %v1165, %v1175
    %v1182 = vmul.f32 %v1166, %v1171
    %v1183 = vmul.f32 %v1167, %v1175
    %v1184 = vadd.f32 %v722, %v1176
    %v1185 = vadd.f32 %v723, %v1177
    %v1186 = vadd.f32 %v724, %v1178
    %v1187 = vadd.f32 %v725, %v1179
    %v1188 = vadd.f32 %v726, %v1180
    %v1189 = vadd.f32 %v727, %v1181
    %v1190 = vadd.f32 %v728, %v1182
    %v1191 = vadd.f32 %v729, %v1183
    %s1192 = scalar_lea.vmem [#allocation7], 64
    %1193 = vst [vmem:[%s1192] sm:$0xff] %v1184
    %1194 = vst [vmem:[%s1192 + $0x8] sm:$0xff] %v1185
    %1195 = vst [vmem:[%s1192 + $0x10] sm:$0xff] %v1186
    %1196 = vst [vmem:[%s1192 + $0x18] sm:$0xff] %v1187
    %1197 = vst [vmem:[%s1192 + $0x20] sm:$0xff] %v1188
    %1198 = vst [vmem:[%s1192 + $0x28] sm:$0xff] %v1189
    %1199 = vst [vmem:[%s1192 + $0x30] sm:$0xff] %v1190
    %1200 = vst [vmem:[%s1192 + $0x38] sm:$0xff] %v1191
    // Predicated region
    $region22: #{tpu_custom_call.1} parent=1 // pred_check
      _
    $region23: #{tpu_custom_call.1} parent=1 // pred_check_branch
      %1202 = sbr.rel (0) target = $region25
    $region24: #{tpu_custom_call.1} parent=1 // pred_region
      %s1204 = ssub.s32 2048, 2048
      %1205 = vsyncadd [#allocation4], %s1204
      %s1206 = sshll.u32 [#allocation7], 4
      %s1207 = int_to_ptr.vmem [resolvable:$true] %s1206
      %1212 = dma.vmem_to_hbm [thread:$0]  %s1207, 2048, %s3, [#allocation4], 256, 256, 16
    $region25: #{tpu_custom_call.1} parent=1 // pred_fallthru
      _
    // Predicated region
    $region26: #{tpu_custom_call.1} parent=1 // pred_check
      _
    $region27: #{tpu_custom_call.1} parent=1 // pred_check_branch
      %1214 = sbr.rel (0) target = $region29
    $region28: #{tpu_custom_call.1} parent=1 // pred_region
      %1215 = dma.done [#allocation4], 2048
    $region29: #{tpu_custom_call.1} parent=1 // pred_fallthru
      _
    %1216 = vsyncpa [#allocation3], 1
    %1217 = vsyncpa [#allocation4], 1
    %1218 = vsyncpa [#allocation5], 1

</llo_original>
